<compile_context>
chip_gen: v5e
topology: v5e:2x2
jax: 0.10.0
libtpu: 0.0.40
codegen_flags: <defaults>
</compile_context>

<pallas_src>
import functools
import math

import jax
import jax.numpy as jnp
from jax import lax
from jax.experimental import pallas as pl
from jax.experimental.pallas import tpu as pltpu

LN_EPS = 1e-5                      # nn.LayerNorm default eps
_INV_SQRT2 = 1.0 / math.sqrt(2.0)


def _projection_kernel(x_ref, w1_ref, w2_ref, gamma_ref, beta_ref, o_ref):
    # x_ref:     (TR, d_in)     row tile, input dtype (f32 / bf16)
    # w1_ref:    (d_in, d_out)  resident linear1 weight (pre-transposed)
    # w2_ref:    (d_out, d_out) resident linear2 weight (pre-transposed)
    # gamma_ref: (1, d_out)     LayerNorm weight
    # beta_ref:  (1, d_out)     LayerNorm bias
    # o_ref:     (TR, d_out)

    # embed1 = linear1(x): MXU matmul in the native dtype, f32 accumulate.
    e1 = jnp.dot(x_ref[...], w1_ref[...], preferred_element_type=jnp.float32)

    # Exact erf-based GELU (matches torch.nn.functional.gelu default), in f32.
    g = 0.5 * e1 * (1.0 + lax.erf(e1 * _INV_SQRT2))

    # embed2 = dropout(linear2(gelu(embed1)))
    # Cast activation back to the weight dtype so the second matmul also runs
    # at native MXU rate (no-op for f32 inputs).
    # TODO(synk): dropout is identity (eval mode); training-mode dropout would
    # use pltpu.prng_seed / pltpu.prng_random_bits.
    e2 = jnp.dot(g.astype(w2_ref.dtype), w2_ref[...],
                 preferred_element_type=jnp.float32)

    # Residual adds linear1's *pre-GELU* output (embed1 + embed2, exactly as
    # in the PyTorch module), then LayerNorm over the feature axis in f32.
    h = e1 + e2
    mean = jnp.mean(h, axis=-1, keepdims=True)
    centered = h - mean
    var = jnp.mean(centered * centered, axis=-1, keepdims=True)
    norm = centered * lax.rsqrt(var + LN_EPS)

    gamma = gamma_ref[...].astype(jnp.float32)
    beta = beta_ref[...].astype(jnp.float32)
    o_ref[...] = (norm * gamma + beta).astype(o_ref.dtype)


def _round_up(n: int, m: int) -> int:
    return ((n + m - 1) // m) * m


def _sublane_multiple(dtype) -> int:
    # 8 rows for 32-bit, 16 for bf16, 32 for int8/fp8 (packed sublanes).
    bits = jnp.dtype(dtype).itemsize * 8
    return max(8, 256 // bits)


def _vmem_bytes(tile: int, d_in: int, d_out: int, itemsize: int) -> int:
    x_bufs = 2 * tile * d_in * itemsize            # double-buffered input tile
    out_bufs = 2 * tile * d_out * itemsize         # double-buffered output tile
    weights = (d_in * d_out + d_out * d_out + 2 * d_out) * itemsize  # 1-buffered
    f32_tmp = 3 * tile * d_out * 4                 # e1, e2/g, h live f32 temps
    return x_bufs + out_bufs + weights + f32_tmp


def _vmem_budget_bytes() -> int:
    # ~75% of physical per-core VMEM; conservative v7x default if query fails.
    try:
        cap = int(pltpu.get_tpu_info().vmem_capacity_bytes)
    except Exception:
        cap = 64 * 1024 * 1024
    return (cap * 3) // 4


@functools.partial(jax.jit, static_argnames=("row_tile",))
def projection_pallas(x, w1_t, w2_t, gamma, beta, *, row_tile=1024):
    """Fused Projection forward.

    x:     (..., d_in)
    w1_t:  (d_in, d_out)   linear1 weight, pre-transposed (nn.Linear stores (out, in))
    w2_t:  (d_out, d_out)  linear2 weight, pre-transposed
    gamma: (d_out,)        LayerNorm weight
    beta:  (d_out,)        LayerNorm bias
    """
    d_in = x.shape[-1]
    d_out = w1_t.shape[-1]
    lead = x.shape[:-1]

    x2d = x.reshape(-1, d_in)
    n_rows = x2d.shape[0]
    itemsize = jnp.dtype(x.dtype).itemsize

    # --- Row-tile selection -------------------------------------------------
    # Dtype-aware sublane rounding; keep the grid >= 2 steps (megacore split
    # on v7x) whenever the row count allows it.
    sub = _sublane_multiple(x.dtype)
    tile = min(row_tile, _round_up(pl.cdiv(n_rows, 2), sub))
    tile = max(tile, sub)

    # Shrink the tile if the VMEM requirement would exceed ~75% of physical
    # VMEM (binding first on v7x's 64 MiB).
    budget = _vmem_budget_bytes()
    while tile > sub and _vmem_bytes(tile, d_in, d_out, itemsize) > budget:
        tile = max(sub, _round_up(tile // 2, sub))
    # TODO(synk): for very large d_out (>= 4096) the (tile, d_out) f32
    # intermediates dominate; add a second grid axis tiling d_out with a VMEM
    # accumulator + pl.when finalize instead of only shrinking the row tile.

    grid = (pl.cdiv(n_rows, tile),)

    # Scoped VMEM limit: requirement with 2x headroom for compiler-internal
    # scratch, clamped to the physical-VMEM-derived budget.
    vmem_limit = int(min(budget,
                         max(2 * _vmem_bytes(tile, d_in, d_out, itemsize),
                             16 * 1024 * 1024)))

    gamma2d = gamma.reshape(1, d_out)
    beta2d = beta.reshape(1, d_out)

    # Weights / LN params are revisited with a constant index_map; a second
    # pipeline buffer would be pure VMEM waste -> single-buffered.
    resident = pl.Buffered(1)

    # Advisory cost estimate so XLA schedules producers/consumers around the
    # custom call correctly.
    cost = pl.CostEstimate(
        flops=2 * n_rows * d_out * (d_in + d_out),
        transcendentals=n_rows * d_out,
        bytes_accessed=(n_rows * d_in + d_in * d_out + d_out * d_out
                        + n_rows * d_out) * itemsize + 2 * d_out * 4,
    )

    # Note: the last row block may be partial; Pallas masks the out-of-bounds
    # writes, and every op in the kernel is per-row, so the garbage tail rows
    # in the partial input block cannot contaminate valid rows.
    out = pl.pallas_call(
        _projection_kernel,
        out_shape=jax.ShapeDtypeStruct((n_rows, d_out), x.dtype),
        grid_spec=pltpu.PrefetchScalarGridSpec(
            num_scalar_prefetch=0,
            grid=grid,
            in_specs=[
                pl.BlockSpec((tile, d_in), lambda i: (i, 0)),
                pl.BlockSpec((d_in, d_out), lambda i: (0, 0),
                             pipeline_mode=resident),
                pl.BlockSpec((d_out, d_out), lambda i: (0, 0),
                             pipeline_mode=resident),
                pl.BlockSpec((1, d_out), lambda i: (0, 0),
                             pipeline_mode=resident),
                pl.BlockSpec((1, d_out), lambda i: (0, 0),
                             pipeline_mode=resident),
            ],
            out_specs=pl.BlockSpec((tile, d_out), lambda i: (i, 0)),
        ),
        compiler_params=pltpu.CompilerParams(
            # Row axis is embarrassingly parallel -> megacore split.
            dimension_semantics=("parallel",),
            vmem_limit_bytes=vmem_limit,
        ),
        cost_estimate=cost,
    )(x2d, w1_t, w2_t, gamma2d, beta2d)

    return out.reshape(*lead, d_out)


def projection_ref(x, w1_t, w2_t, gamma, beta):
    """Pure-JAX reference of the PyTorch forward (dropout in eval mode)."""
    f32 = jnp.float32
    xf = x.astype(f32)
    e1 = jnp.dot(xf, w1_t.astype(f32), precision=lax.Precision.HIGHEST)
    g = 0.5 * e1 * (1.0 + lax.erf(e1 * _INV_SQRT2))
    e2 = jnp.dot(g, w2_t.astype(f32), precision=lax.Precision.HIGHEST)
    h = e1 + e2
    mean = h.mean(-1, keepdims=True)
    var = ((h - mean) ** 2).mean(-1, keepdims=True)
    return (h - mean) * lax.rsqrt(var + LN_EPS) * gamma.astype(f32) + beta.astype(f32)


if __name__ == "__main__":
    key = jax.random.PRNGKey(0)
    # 300 rows -> exercises the partial last block (no wrapper-side padding);
    # 128-wide features keep the lane axis dense.
    batch, seq, d_in, d_out = 3, 100, 128, 128

    k_x, k_w1, k_w2, k_g, k_b = jax.random.split(key, 5)
    x = jax.random.normal(k_x, (batch, seq, d_in), dtype=jnp.float32)

    # nn.Linear(bias=False) stores weight as (out, in); kaiming-uniform-like init.
    bound1 = 1.0 / math.sqrt(d_in)
    bound2 = 1.0 / math.sqrt(d_out)
    w1 = jax.random.uniform(k_w1, (d_out, d_in), minval=-bound1, maxval=bound1,
                            dtype=jnp.float32)
    w2 = jax.random.uniform(k_w2, (d_out, d_out), minval=-bound2, maxval=bound2,
                            dtype=jnp.float32)
    # Non-trivial LayerNorm affine so the epilogue is actually exercised.
    gamma = 1.0 + 0.1 * jax.random.normal(k_g, (d_out,), dtype=jnp.float32)
    beta = 0.1 * jax.random.normal(k_b, (d_out,), dtype=jnp.float32)

    w1_t = w1.T   # (d_in, d_out)
    w2_t = w2.T   # (d_out, d_out)

    # float32 run + correctness check.
    out = jax.block_until_ready(projection_pallas(x, w1_t, w2_t, gamma, beta))
    ref = projection_ref(x, w1_t, w2_t, gamma, beta)
    assert out.shape == (batch, seq, d_out)
    assert jnp.allclose(out, ref, atol=2e-3, rtol=2e-3), "f32 mismatch vs reference"

    # bf16 run (the production path: bf16 MXU operands, f32 accumulation).
    xb = x.astype(jnp.bfloat16)
    w1b = w1_t.astype(jnp.bfloat16)
    w2b = w2_t.astype(jnp.bfloat16)
    out_bf16 = jax.block_until_ready(projection_pallas(xb, w1b, w2b, gamma, beta))
    ref_bf16 = projection_ref(xb, w1b, w2b, gamma, beta)
    assert out_bf16.shape == (batch, seq, d_out)
    assert out_bf16.dtype == jnp.bfloat16
    assert jnp.allclose(out_bf16.astype(jnp.float32), ref_bf16,
                        atol=5e-2, rtol=5e-2), "bf16 mismatch vs reference"

    print("KERNEL_OK")
</pallas_src>

<mosaic_0001>
module attributes {stable_mosaic.version = 11 : i64} {
  func.func @_projection_kernel(%arg0: i32, %arg1: memref<152x128xf32, #tpu.memory_space<vmem>>, %arg2: memref<128x128xf32, #tpu.memory_space<vmem>>, %arg3: memref<128x128xf32, #tpu.memory_space<vmem>>, %arg4: memref<1x128xf32, #tpu.memory_space<vmem>>, %arg5: memref<1x128xf32, #tpu.memory_space<vmem>>, %arg6: memref<152x128xf32, #tpu.memory_space<vmem>>) attributes {dimension_semantics = [#tpu.dimension_semantics<parallel>], iteration_bounds = array<i64: 2>, scalar_prefetch = 0 : i64, scratch_operands = 0 : i64, tpu.core_type = #tpu.core_type<tc>, window_params = [{transform_indices = @transform_0, window_bounds = array<i64: 152, 128>}, {pipeline_mode = #tpu.pipeline_mode<synchronous>, transform_indices = @transform_1, window_bounds = array<i64: 128, 128>}, {pipeline_mode = #tpu.pipeline_mode<synchronous>, transform_indices = @transform_2, window_bounds = array<i64: 128, 128>}, {pipeline_mode = #tpu.pipeline_mode<synchronous>, transform_indices = @transform_3, window_bounds = array<i64: 1, 128>}, {pipeline_mode = #tpu.pipeline_mode<synchronous>, transform_indices = @transform_4, window_bounds = array<i64: 1, 128>}, {transform_indices = @transform_5, window_bounds = array<i64: 152, 128>}]} {
    %c0 = arith.constant 0 : index
    %c0_0 = arith.constant 0 : index
    %0 = vector.load %arg1[%c0, %c0_0] : memref<152x128xf32, #tpu.memory_space<vmem>>, vector<152x128xf32>
    %c0_1 = arith.constant 0 : index
    %c0_2 = arith.constant 0 : index
    %1 = vector.load %arg2[%c0_1, %c0_2] : memref<128x128xf32, #tpu.memory_space<vmem>>, vector<128x128xf32>
    %cst = arith.constant dense<0.000000e+00> : vector<152x128xf32>
    %2 = tpu.matmul %0, %1, %cst {dimension_numbers = #tpu.dot_dimension_numbers<[1], [0], [0], [1], [0, 0, 1, 1], [], []>} : vector<152x128xf32>, vector<128x128xf32>, vector<152x128xf32> -> vector<152x128xf32>
    %cst_3 = arith.constant 5.000000e-01 : f32
    %3 = vector.broadcast %cst_3 : f32 to vector<152x128xf32>
    %4 = arith.mulf %3, %2 : vector<152x128xf32>
    %cst_4 = arith.constant 0.707106769 : f32
    %5 = vector.broadcast %cst_4 : f32 to vector<152x128xf32>
    %6 = arith.mulf %2, %5 : vector<152x128xf32>
    %7 = math.erf %6 : vector<152x128xf32>
    %cst_5 = arith.constant 1.000000e+00 : f32
    %8 = vector.broadcast %cst_5 : f32 to vector<152x128xf32>
    %9 = arith.addf %8, %7 : vector<152x128xf32>
    %10 = arith.mulf %4, %9 : vector<152x128xf32>
    %c0_6 = arith.constant 0 : index
    %c0_7 = arith.constant 0 : index
    %11 = vector.load %arg3[%c0_6, %c0_7] : memref<128x128xf32, #tpu.memory_space<vmem>>, vector<128x128xf32>
    %cst_8 = arith.constant dense<0.000000e+00> : vector<152x128xf32>
    %12 = tpu.matmul %10, %11, %cst_8 {dimension_numbers = #tpu.dot_dimension_numbers<[1], [0], [0], [1], [0, 0, 1, 1], [], []>} : vector<152x128xf32>, vector<128x128xf32>, vector<152x128xf32> -> vector<152x128xf32>
    %13 = arith.addf %2, %12 : vector<152x128xf32>
    %cst_9 = arith.constant dense<0.000000e+00> : vector<152xf32>
    %14 = vector.multi_reduction <add>, %13, %cst_9 [1] : vector<152x128xf32> to vector<152xf32>
    %15 = vector.shape_cast %14 : vector<152xf32> to vector<152x1xf32>
    %cst_10 = arith.constant 1.280000e+02 : f32
    %16 = vector.broadcast %cst_10 : f32 to vector<152x1xf32>
    %17 = arith.divf %15, %16 : vector<152x1xf32>
    %18 = vector.broadcast %17 : vector<152x1xf32> to vector<152x128xf32>
    %19 = arith.subf %13, %18 : vector<152x128xf32>
    %20 = arith.mulf %19, %19 : vector<152x128xf32>
    %cst_11 = arith.constant dense<0.000000e+00> : vector<152xf32>
    %21 = vector.multi_reduction <add>, %20, %cst_11 [1] : vector<152x128xf32> to vector<152xf32>
    %22 = vector.shape_cast %21 : vector<152xf32> to vector<152x1xf32>
    %cst_12 = arith.constant 1.280000e+02 : f32
    %23 = vector.broadcast %cst_12 : f32 to vector<152x1xf32>
    %24 = arith.divf %22, %23 : vector<152x1xf32>
    %cst_13 = arith.constant 9.99999974E-6 : f32
    %25 = vector.broadcast %cst_13 : f32 to vector<152x1xf32>
    %26 = arith.addf %24, %25 : vector<152x1xf32>
    %27 = math.rsqrt %26 : vector<152x1xf32>
    %28 = vector.broadcast %27 : vector<152x1xf32> to vector<152x128xf32>
    %29 = arith.mulf %19, %28 : vector<152x128xf32>
    %c0_14 = arith.constant 0 : index
    %c0_15 = arith.constant 0 : index
    %30 = vector.load %arg4[%c0_14, %c0_15] : memref<1x128xf32, #tpu.memory_space<vmem>>, vector<1x128xf32>
    %c0_16 = arith.constant 0 : index
    %c0_17 = arith.constant 0 : index
    %31 = vector.load %arg5[%c0_16, %c0_17] : memref<1x128xf32, #tpu.memory_space<vmem>>, vector<1x128xf32>
    %32 = vector.broadcast %30 : vector<1x128xf32> to vector<152x128xf32>
    %33 = arith.mulf %29, %32 : vector<152x128xf32>
    %34 = vector.broadcast %31 : vector<1x128xf32> to vector<152x128xf32>
    %35 = arith.addf %33, %34 : vector<152x128xf32>
    %c0_18 = arith.constant 0 : index
    %c0_19 = arith.constant 0 : index
    %36 = vector.load %arg6[%c0_18, %c0_19] : memref<152x128xf32, #tpu.memory_space<vmem>>, vector<152x128xf32>
    tpu.vector_store %arg6[%c0_18, %c0_19], %35 {strides = array<i32>} : memref<152x128xf32, #tpu.memory_space<vmem>>, vector<152x128xf32>,
    return
  }
  func.func @transform_0(%arg0: i32) -> (i32, i32) {
    %c0_i32 = arith.constant 0 : i32
    %c0_i32_0 = arith.constant 0 : i32
    return %arg0, %c0_i32 : i32, i32
  }
  func.func @transform_1(%arg0: i32) -> (i32, i32) {
    %c0_i32 = arith.constant 0 : i32
    %c0_i32_0 = arith.constant 0 : i32
    %c0_i32_1 = arith.constant 0 : i32
    return %c0_i32, %c0_i32_0 : i32, i32
  }
  func.func @transform_2(%arg0: i32) -> (i32, i32) {
    %c0_i32 = arith.constant 0 : i32
    %c0_i32_0 = arith.constant 0 : i32
    %c0_i32_1 = arith.constant 0 : i32
    return %c0_i32, %c0_i32_0 : i32, i32
  }
  func.func @transform_3(%arg0: i32) -> (i32, i32) {
    %c0_i32 = arith.constant 0 : i32
    %c0_i32_0 = arith.constant 0 : i32
    %c0_i32_1 = arith.constant 0 : i32
    return %c0_i32, %c0_i32_0 : i32, i32
  }
  func.func @transform_4(%arg0: i32) -> (i32, i32) {
    %c0_i32 = arith.constant 0 : i32
    %c0_i32_0 = arith.constant 0 : i32
    %c0_i32_1 = arith.constant 0 : i32
    return %c0_i32, %c0_i32_0 : i32, i32
  }
  func.func @transform_5(%arg0: i32) -> (i32, i32) {
    %c0_i32 = arith.constant 0 : i32
    %c0_i32_0 = arith.constant 0 : i32
    return %arg0, %c0_i32 : i32, i32
  }
}

</mosaic_0001>

<llo_original>
// kernel: projection_pallas.1
$region0: #{projection_pallas.1}
  #allocation0 [shape = 'u32[]', space=smem, size = 0x4, offset = 0x4, fixed_abs, tag = 'smem constant byte address 0x4 - core index']
  #allocation1 [shape = 'u32[72,128]{1,0:T(1,128)}', space=vmem, size = 0x9000, scoped, tag = 'internal scratch']
  %s0 = inlined_call_operand.vmem [shape: f32[300,128], index: 0, kind: input, shape index: {}]
  %s1 = inlined_call_operand.vmem [shape: f32[128,128], index: 1, kind: input, shape index: {}]
  %s2 = inlined_call_operand.vmem [shape: f32[128,128], index: 2, kind: input, shape index: {}]
  %s3 = inlined_call_operand.vmem [shape: f32[1,128], index: 3, kind: input, shape index: {}]
  %s4 = inlined_call_operand.vmem [shape: f32[1,128], index: 4, kind: input, shape index: {}]
  %s5 = inlined_call_operand.vmem [shape: f32[300,128], index: 5, kind: output, shape index: {}]
  %s6 = sld [smem:[#allocation0]]
  $region53: #{projection_pallas.1} parent=0
    _
  %s8 = ssub.s32 1, %s6
  %s9 = scalar_select 0, %s8, %s6
  loop: start=0, step=1, limit=4
  $region2: #{projection_pallas.1} parent=0 // loop_pre_header
    _
  $region3: #{projection_pallas.1} parent=0 // loop_header
    %s11 = sphi 0, %s15
    %p12 = scmp.ge.s32.totalorder %s11, 4
    %s21 = sphi 0, %s23
    %s24 = sphi 0, %s21
    %s25 = sphi 0, %s24
    %s41 = sphi 0, %s25
    %s45 = sphi 0, %s45
    %s47 = sphi 0, %s45
    %s48 = sphi 0, %s47
    %s62 = sphi 0, %s48
    %s66 = sphi 0, %s66
    %s68 = sphi 0, %s66
    %s69 = sphi 0, %s68
    %s83 = sphi 0, %s69
    %s87 = sphi 0, %s87
    %s89 = sphi 0, %s87
    %s90 = sphi 0, %s89
    %s104 = sphi 0, %s90
    %s108 = sphi 0, %s108
    %s110 = sphi 0, %s108
    %s111 = sphi 0, %s110
    %s125 = sphi 0, %s111
    %s131 = sphi 0, %s133
    %s134 = sphi 0, %s131
    %s135 = sphi 0, %s134
    %s151 = sphi 0, %s135
  $region4: #{projection_pallas.1} parent=0 // loop_header_branch
    %14 = sbr.rel (%p12) target = $region8
  $region5: #{projection_pallas.1} parent=0 // loop_body
    %s16 = ssub.s32 %s11, 1
    %s17 = ssub.s32 %s11, 2
    %s18 = sadd.s32 %s11, 1
    %s19 = ssub.s32 %s11, %s18
    %p20 = scmp.eq.s32.totalorder %s19, 0
    %s22 = sadd.s32 %s21, 1
    %s23 = scalar_select %p20, %s21, %s22
    %p26 = pneg %p20
    %p27 = scmp.eq.s32.totalorder %s11, 1
    %p28 = por %p26, %p27
    %p29 = scmp.ne.s32.totalorder %s21, %s24
    %p30 = scmp.eq.s32.totalorder %s11, 0
    %p31 = por %p29, %p30
    %p32 = scmp.ne.s32.totalorder %s21, %s24
    %p33 = scmp.eq.s32.totalorder %s16, 1
    %p34 = por %p32, %p33
    %p35 = scmp.ne.s32.totalorder %s24, %s25
    %p36 = scmp.eq.s32.totalorder %s16, 0
    %p37 = por %p35, %p36
    %p38 = scmp.ne.s32.totalorder %s24, %s25
    %p39 = scmp.eq.s32.totalorder %s17, 1
    %p40 = por %p38, %p39
    %p42 = scmp.ne.s32.totalorder %s25, %s41
    %p43 = scmp.eq.s32.totalorder %s17, 0
    %p44 = por %p42, %p43
    %s46 = sadd.s32 %s45, 1
    %p49 = scmp.eq.s32.totalorder %s11, 1
    %p50 = scmp.ne.s32.totalorder %s45, %s47
    %p51 = scmp.eq.s32.totalorder %s11, 0
    %p52 = por %p50, %p51
    %p53 = scmp.ne.s32.totalorder %s45, %s47
    %p54 = scmp.eq.s32.totalorder %s16, 1
    %p55 = por %p53, %p54
    %p56 = scmp.ne.s32.totalorder %s47, %s48
    %p57 = scmp.eq.s32.totalorder %s16, 0
    %p58 = por %p56, %p57
    %p59 = scmp.ne.s32.totalorder %s47, %s48
    %p60 = scmp.eq.s32.totalorder %s17, 1
    %p61 = por %p59, %p60
    %p63 = scmp.ne.s32.totalorder %s48, %s62
    %p64 = scmp.eq.s32.totalorder %s17, 0
    %p65 = por %p63, %p64
    %s67 = sadd.s32 %s66, 1
    %p70 = scmp.eq.s32.totalorder %s11, 1
    %p71 = scmp.ne.s32.totalorder %s66, %s68
    %p72 = scmp.eq.s32.totalorder %s11, 0
    %p73 = por %p71, %p72
    %p74 = scmp.ne.s32.totalorder %s66, %s68
    %p75 = scmp.eq.s32.totalorder %s16, 1
    %p76 = por %p74, %p75
    %p77 = scmp.ne.s32.totalorder %s68, %s69
    %p78 = scmp.eq.s32.totalorder %s16, 0
    %p79 = por %p77, %p78
    %p80 = scmp.ne.s32.totalorder %s68, %s69
    %p81 = scmp.eq.s32.totalorder %s17, 1
    %p82 = por %p80, %p81
    %p84 = scmp.ne.s32.totalorder %s69, %s83
    %p85 = scmp.eq.s32.totalorder %s17, 0
    %p86 = por %p84, %p85
    %s88 = sadd.s32 %s87, 1
    %p91 = scmp.eq.s32.totalorder %s11, 1
    %p92 = scmp.ne.s32.totalorder %s87, %s89
    %p93 = scmp.eq.s32.totalorder %s11, 0
    %p94 = por %p92, %p93
    %p95 = scmp.ne.s32.totalorder %s87, %s89
    %p96 = scmp.eq.s32.totalorder %s16, 1
    %p97 = por %p95, %p96
    %p98 = scmp.ne.s32.totalorder %s89, %s90
    %p99 = scmp.eq.s32.totalorder %s16, 0
    %p100 = por %p98, %p99
    %p101 = scmp.ne.s32.totalorder %s89, %s90
    %p102 = scmp.eq.s32.totalorder %s17, 1
    %p103 = por %p101, %p102
    %p105 = scmp.ne.s32.totalorder %s90, %s104
    %p106 = scmp.eq.s32.totalorder %s17, 0
    %p107 = por %p105, %p106
    %s109 = sadd.s32 %s108, 1
    %p112 = scmp.eq.s32.totalorder %s11, 1
    %p113 = scmp.ne.s32.totalorder %s108, %s110
    %p114 = scmp.eq.s32.totalorder %s11, 0
    %p115 = por %p113, %p114
    %p116 = scmp.ne.s32.totalorder %s108, %s110
    %p117 = scmp.eq.s32.totalorder %s16, 1
    %p118 = por %p116, %p117
    %p119 = scmp.ne.s32.totalorder %s110, %s111
    %p120 = scmp.eq.s32.totalorder %s16, 0
    %p121 = por %p119, %p120
    %p122 = scmp.ne.s32.totalorder %s110, %s111
    %p123 = scmp.eq.s32.totalorder %s17, 1
    %p124 = por %p122, %p123
    %p126 = scmp.ne.s32.totalorder %s111, %s125
    %p127 = scmp.eq.s32.totalorder %s17, 0
    %p128 = por %p126, %p127
    %s129 = ssub.s32 %s11, %s18
    %p130 = scmp.eq.s32.totalorder %s129, 0
    %s132 = sadd.s32 %s131, 1
    %s133 = scalar_select %p130, %s131, %s132
    %p136 = pneg %p130
    %p137 = scmp.eq.s32.totalorder %s11, 1
    %p138 = por %p136, %p137
    %p139 = scmp.ne.s32.totalorder %s131, %s134
    %p140 = scmp.eq.s32.totalorder %s11, 0
    %p141 = por %p139, %p140
    %p142 = scmp.ne.s32.totalorder %s131, %s134
    %p143 = scmp.eq.s32.totalorder %s16, 1
    %p144 = por %p142, %p143
    %p145 = scmp.ne.s32.totalorder %s134, %s135
    %p146 = scmp.eq.s32.totalorder %s16, 0
    %p147 = por %p145, %p146
    %p148 = scmp.ne.s32.totalorder %s134, %s135
    %p149 = scmp.eq.s32.totalorder %s17, 1
    %p150 = por %p148, %p149
    %p152 = scmp.ne.s32.totalorder %s135, %s151
    %p153 = scmp.eq.s32.totalorder %s17, 0
    %p154 = por %p152, %p153
    %p155 = scmp.le.s32.totalorder 1, %s11
    %p156 = scmp.lt.s32.totalorder %s11, 3
    %p157 = pnand %p155, %p156
    %p158 = pneg %p157
    // Predicated region
    $region9: #{projection_pallas.1} parent=5 // pred_check
      _
    $region10: #{projection_pallas.1} parent=5 // pred_check_branch
      %160 = sbr.rel (%p157) target = $region12
    $region11: #{projection_pallas.1} parent=5 // pred_region
      %s161 = ssub.s32 %s11, 1
      // Predicated region
      $region13: #{projection_pallas.1} parent=11 // pred_check
        %p162 = pneg %p58
      $region14: #{projection_pallas.1} parent=11 // pred_check_branch
        %164 = sbr.rel (%p162) target = $region16
      $region15: #{projection_pallas.1} parent=11 // pred_region
        _
      $region16: #{projection_pallas.1} parent=11 // pred_fallthru
        _
      // Predicated region
      $region17: #{projection_pallas.1} parent=11 // pred_check
        %p165 = pneg %p79
      $region18: #{projection_pallas.1} parent=11 // pred_check_branch
        %167 = sbr.rel (%p165) target = $region20
      $region19: #{projection_pallas.1} parent=11 // pred_region
        _
      $region20: #{projection_pallas.1} parent=11 // pred_fallthru
        _
      // Predicated region
      $region21: #{projection_pallas.1} parent=11 // pred_check
        %p168 = pneg %p100
      $region22: #{projection_pallas.1} parent=11 // pred_check_branch
        %170 = sbr.rel (%p168) target = $region24
      $region23: #{projection_pallas.1} parent=11 // pred_region
        _
      $region24: #{projection_pallas.1} parent=11 // pred_fallthru
        _
      // Predicated region
      $region25: #{projection_pallas.1} parent=11 // pred_check
        %p171 = pneg %p121
      $region26: #{projection_pallas.1} parent=11 // pred_check_branch
        %173 = sbr.rel (%p171) target = $region28
      $region27: #{projection_pallas.1} parent=11 // pred_region
        _
      $region28: #{projection_pallas.1} parent=11 // pred_fallthru
        _
    $region12: #{projection_pallas.1} parent=5 // pred_fallthru
      _
    %p174 = scmp.lt.s32.totalorder %s11, 2
    // Predicated region
    $region29: #{projection_pallas.1} parent=5 // pred_check
      %p175 = pneg %p174
    $region30: #{projection_pallas.1} parent=5 // pred_check_branch
      %177 = sbr.rel (%p175) target = $region32
    $region31: #{projection_pallas.1} parent=5 // pred_region
      // Predicated region
      $region33: #{projection_pallas.1} parent=31 // pred_check
        %p178 = pneg %p31
      $region34: #{projection_pallas.1} parent=31 // pred_check_branch
        %180 = sbr.rel (%p178) target = $region36
      $region35: #{projection_pallas.1} parent=31 // pred_region
        %s181 = smul.u32 19, %s11
        %p182 = scmp.lt.s32.totalorder %s181, 37
        %s183 = scalar_select %p182, %s181, 37
        %s184 = smul.addr %s183, 8
        %s185 = scalar_lea.vmem %s0, %s184
        %s186 = smul.u32 19, %s11
      $region36: #{projection_pallas.1} parent=31 // pred_fallthru
        _
    $region32: #{projection_pallas.1} parent=5 // pred_fallthru
      _
    %p187 = scmp.le.s32.totalorder 1, %s11
    %p188 = scmp.lt.s32.totalorder %s11, 3
    %p189 = pnand %p187, %p188
    %p190 = pneg %p189
    // Predicated region
    $region37: #{projection_pallas.1} parent=5 // pred_check
      _
    $region38: #{projection_pallas.1} parent=5 // pred_check_branch
      %192 = sbr.rel (%p189) target = $region40
    $region39: #{projection_pallas.1} parent=5 // pred_region
      %s193 = ssub.s32 %s11, 1
      %s194 = smul.u32 19, %s16
      %p195 = scmp.lt.s32.totalorder %s194, 37
      %s196 = scalar_select %p195, %s194, 37
      %s197 = smul.addr %s196, 8
      %s198 = scalar_lea.vmem %s0, %s197
      %p199 = pneg %p37
      %p200 = pneg %p34
      %p201 = pneg %p58
      %p202 = pneg %p55
      %p203 = pneg %p79
      %p204 = pneg %p76
      %p205 = pneg %p100
      %p206 = pneg %p97
      %p207 = pneg %p121
      %p208 = pneg %p118
      %p209 = pneg %p147
      %p210 = pneg %p144
      %s211 = smul.u32 19, %s16
      %p212 = scmp.lt.s32.totalorder %s211, 37
      %s213 = scalar_select %p212, %s211, 37
      %s214 = smul.addr %s213, 8
      %s215 = scalar_lea.vmem %s5, %s214
      %s216 = smul.u32 19, %s16
      %p217 = scmp.lt.s32.totalorder %s216, 37
      %s218 = scalar_select %p217, %s216, 37
      %s219 = smul.addr %s218, 8
      %s220 = scalar_lea.vmem %s0, %s219
      %s221 = smul.u32 19, %s16
      %s222 = smul.u32 19, %s16
      %p223 = scmp.lt.s32.totalorder %s222, 37
      %s224 = scalar_select %p223, %s222, 37
      %s225 = smul.addr %s224, 8
      %s226 = scalar_lea.vmem %s5, %s225
      %s227 = smul.u32 19, %s16
      %v228 = vld [vmem:[%s220] sm:$0xff]
      %v229 = vld [vmem:[%s220 + $0x8] sm:$0xff]
      %v230 = vld [vmem:[%s220 + $0x10] sm:$0xff]
      %v231 = vld [vmem:[%s220 + $0x18] sm:$0xff]
      %v232 = vld [vmem:[%s220 + $0x20] sm:$0xff]
      %v233 = vld [vmem:[%s220 + $0x28] sm:$0xff]
      %v234 = vld [vmem:[%s220 + $0x30] sm:$0xff]
      %v235 = vld [vmem:[%s220 + $0x38] sm:$0xff]
      %v236 = vld [vmem:[%s220 + $0x40] sm:$0xff]
      %v237 = vld [vmem:[%s220 + $0x48] sm:$0xff]
      %v238 = vld [vmem:[%s220 + $0x50] sm:$0xff]
      %v239 = vld [vmem:[%s220 + $0x58] sm:$0xff]
      %v240 = vld [vmem:[%s220 + $0x60] sm:$0xff]
      %v241 = vld [vmem:[%s220 + $0x68] sm:$0xff]
      %v242 = vld [vmem:[%s220 + $0x70] sm:$0xff]
      %v243 = vld [vmem:[%s220 + $0x78] sm:$0xff]
      %v244 = vld [vmem:[%s220 + $0x80] sm:$0xff]
      %v245 = vld [vmem:[%s220 + $0x88] sm:$0xff]
      %v246 = vld [vmem:[%s220 + $0x90] sm:$0xff]
      %v247 = vld [vmem:[%s1] sm:$0xff]
      %v248 = vld [vmem:[%s1 + $0x8] sm:$0xff]
      %v249 = vld [vmem:[%s1 + $0x10] sm:$0xff]
      %v250 = vld [vmem:[%s1 + $0x18] sm:$0xff]
      %v251 = vld [vmem:[%s1 + $0x20] sm:$0xff]
      %v252 = vld [vmem:[%s1 + $0x28] sm:$0xff]
      %v253 = vld [vmem:[%s1 + $0x30] sm:$0xff]
      %v254 = vld [vmem:[%s1 + $0x38] sm:$0xff]
      %v255 = vld [vmem:[%s1 + $0x40] sm:$0xff]
      %v256 = vld [vmem:[%s1 + $0x48] sm:$0xff]
      %v257 = vld [vmem:[%s1 + $0x50] sm:$0xff]
      %v258 = vld [vmem:[%s1 + $0x58] sm:$0xff]
      %v259 = vld [vmem:[%s1 + $0x60] sm:$0xff]
      %v260 = vld [vmem:[%s1 + $0x68] sm:$0xff]
      %v261 = vld [vmem:[%s1 + $0x70] sm:$0xff]
      %v262 = vld [vmem:[%s1 + $0x78] sm:$0xff]
      %263 = vmatpush.msra.mxu0 %v262
      %264 = vmatpush.msra.mxu0 %v261
      %265 = vmatpush.msra.mxu0 %v260
      %266 = vmatpush.msra.mxu0 %v259
      %267 = vmatpush.msra.mxu0 %v258
      %268 = vmatpush.msra.mxu0 %v257
      %269 = vmatpush.msra.mxu0 %v256
      %270 = vmatpush.msra.mxu0 %v255
      %271 = vmatpush.msra.mxu0 %v254
      %272 = vmatpush.msra.mxu0 %v253
      %273 = vmatpush.msra.mxu0 %v252
      %274 = vmatpush.msra.mxu0 %v251
      %275 = vmatpush.msra.mxu0 %v250
      %276 = vmatpush.msra.mxu0 %v249
      %277 = vmatpush.msra.mxu0 %v248
      %278 = vmatpush.msra.mxu0 %v247
      %279 = vmatmul.f32.gmra.mxu0 %v228
      %v280 = vpop.f32.mrf.mxu0
      %v281 = vadd.f32 0.0, %v280
      %282 = vmatmul.f32.gmra.mxu0 %v229
      %v283 = vpop.f32.mrf.mxu0
      %v284 = vadd.f32 0.0, %v283
      %285 = vmatmul.f32.gmra.mxu0 %v230
      %v286 = vpop.f32.mrf.mxu0
      %v287 = vadd.f32 0.0, %v286
      %288 = vmatmul.f32.gmra.mxu0 %v231
      %v289 = vpop.f32.mrf.mxu0
      %v290 = vadd.f32 0.0, %v289
      %291 = vmatmul.f32.gmra.mxu0 %v232
      %v292 = vpop.f32.mrf.mxu0
      %v293 = vadd.f32 0.0, %v292
      %294 = vmatmul.f32.gmra.mxu0 %v233
      %v295 = vpop.f32.mrf.mxu0
      %v296 = vadd.f32 0.0, %v295
      %297 = vmatmul.f32.gmra.mxu0 %v234
      %v298 = vpop.f32.mrf.mxu0
      %v299 = vadd.f32 0.0, %v298
      %300 = vmatmul.f32.gmra.mxu0 %v235
      %v301 = vpop.f32.mrf.mxu0
      %v302 = vadd.f32 0.0, %v301
      %303 = vmatmul.f32.gmra.mxu0 %v236
      %v304 = vpop.f32.mrf.mxu0
      %v305 = vadd.f32 0.0, %v304
      %306 = vmatmul.f32.gmra.mxu0 %v237
      %v307 = vpop.f32.mrf.mxu0
      %v308 = vadd.f32 0.0, %v307
      %309 = vmatmul.f32.gmra.mxu0 %v238
      %v310 = vpop.f32.mrf.mxu0
      %v311 = vadd.f32 0.0, %v310
      %312 = vmatmul.f32.gmra.mxu0 %v239
      %v313 = vpop.f32.mrf.mxu0
      %v314 = vadd.f32 0.0, %v313
      %315 = vmatmul.f32.gmra.mxu0 %v240
      %v316 = vpop.f32.mrf.mxu0
      %v317 = vadd.f32 0.0, %v316
      %318 = vmatmul.f32.gmra.mxu0 %v241
      %v319 = vpop.f32.mrf.mxu0
      %v320 = vadd.f32 0.0, %v319
      %321 = vmatmul.f32.gmra.mxu0 %v242
      %v322 = vpop.f32.mrf.mxu0
      %v323 = vadd.f32 0.0, %v322
      %324 = vmatmul.f32.gmra.mxu0 %v243
      %v325 = vpop.f32.mrf.mxu0
      %v326 = vadd.f32 0.0, %v325
      %327 = vmatmul.f32.gmra.mxu0 %v244
      %v328 = vpop.f32.mrf.mxu0
      %v329 = vadd.f32 0.0, %v328
      %330 = vmatmul.f32.gmra.mxu0 %v245
      %v331 = vpop.f32.mrf.mxu0
      %v332 = vadd.f32 0.0, %v331
      %333 = vmatmul.f32.gmra.mxu0 %v246
      %v334 = vpop.f32.mrf.mxu0
      %v335 = vadd.f32 0.0, %v334
      %336 = vdwg.mxu0
      %v337 = vmul.f32 %v281, 0.5
      %v338 = vmul.f32 %v284, 0.5
      %v339 = vmul.f32 %v287, 0.5
      %v340 = vmul.f32 %v290, 0.5
      %v341 = vmul.f32 %v293, 0.5
      %v342 = vmul.f32 %v296, 0.5
      %v343 = vmul.f32 %v299, 0.5
      %v344 = vmul.f32 %v302, 0.5
      %v345 = vmul.f32 %v305, 0.5
      %v346 = vmul.f32 %v308, 0.5
      %v347 = vmul.f32 %v311, 0.5
      %v348 = vmul.f32 %v314, 0.5
      %v349 = vmul.f32 %v317, 0.5
      %v350 = vmul.f32 %v320, 0.5
      %v351 = vmul.f32 %v323, 0.5
      %v352 = vmul.f32 %v326, 0.5
      %v353 = vmul.f32 %v329, 0.5
      %v354 = vmul.f32 %v332, 0.5
      %v355 = vmul.f32 %v335, 0.5
      %v356 = vmul.f32 %v281, 0.70710677
      %v357 = vmul.f32 %v284, 0.70710677
      %v358 = vmul.f32 %v287, 0.70710677
      %v359 = vmul.f32 %v290, 0.70710677
      %v360 = vmul.f32 %v293, 0.70710677
      %v361 = vmul.f32 %v296, 0.70710677
      %v362 = vmul.f32 %v299, 0.70710677
      %v363 = vmul.f32 %v302, 0.70710677
      %v364 = vmul.f32 %v305, 0.70710677
      %v365 = vmul.f32 %v308, 0.70710677
      %v366 = vmul.f32 %v311, 0.70710677
      %v367 = vmul.f32 %v314, 0.70710677
      %v368 = vmul.f32 %v317, 0.70710677
      %v369 = vmul.f32 %v320, 0.70710677
      %v370 = vmul.f32 %v323, 0.70710677
      %v371 = vmul.f32 %v326, 0.70710677
      %v372 = vmul.f32 %v329, 0.70710677
      %v373 = vmul.f32 %v332, 0.70710677
      %v374 = vmul.f32 %v335, 0.70710677
      %v375 = vmul.f32 %v356, %v356
      %v376 = vmin.f32 16.0, %v375
      %v377 = vmul.f32 %v376, 2.1237322e-06
      %v378 = vadd.f32 %v377, 0.00028619796
      %v379 = vmul.f32 %v376, %v378
      %v380 = vadd.f32 %v379, 0.0036580483
      %v381 = vmul.f32 %v376, %v380
      %v382 = vadd.f32 %v381, 0.05243302
      %v383 = vmul.f32 %v376, %v382
      %v384 = vadd.f32 %v383, 0.18741608
      %v385 = vmul.f32 %v376, %v384
      %v386 = vadd.f32 %v385, 1.1283791
      %v387 = vmul.f32 %v356, %v386
      %v388 = vmul.f32 %v376, 3.8918573e-05
      %v389 = vadd.f32 %v388, 0.001143296
      %v390 = vmul.f32 %v376, %v389
      %v391 = vadd.f32 %v390, 0.014752088
      %v392 = vmul.f32 %v376, %v391
      %v393 = vadd.f32 %v392, 0.112945676
      %v394 = vmul.f32 %v376, %v393
      %v395 = vadd.f32 %v394, 0.4994258
      %v396 = vmul.f32 %v376, %v395
      %v397 = vadd.f32 %v396, 1.0
      %v398 = vrcp.pop %v397
      %v399 = vmul.f32 %v397, %v398
      %v400 = vsub.f32 1.0, %v399
      %v401 = vmul.f32 %v398, %v400
      %v402 = vadd.f32 %v398, %v401
      %vm403 = vweird.f32 %v397
      %vm404 = vweird.f32 %v398
      %vm405 = vmor %vm403, %vm404
      %v406 = vsel %vm405, %v398, %v402
      %v407 = vand.u32 2147483647, %v397
      %vm408 = vcmp.eq.f32.partialorder %v407, 8.507059e+37
      %v409 = vand.u32 %v397, 2147483648
      %v410 = vor.u32 1.1754944e-38, %v409
      %v411 = vsel %vm408, %v410, %v406
      %v412 = vmul.f32 %v387, %v411
      %v413 = vmin.f32 %v412, 1.0
      %v414 = vmax.f32 %v413, -1.0
      %v415 = vmul.f32 %v357, %v357
      %v416 = vmin.f32 16.0, %v415
      %v417 = vmul.f32 %v416, 2.1237322e-06
      %v418 = vadd.f32 %v417, 0.00028619796
      %v419 = vmul.f32 %v416, %v418
      %v420 = vadd.f32 %v419, 0.0036580483
      %v421 = vmul.f32 %v416, %v420
      %v422 = vadd.f32 %v421, 0.05243302
      %v423 = vmul.f32 %v416, %v422
      %v424 = vadd.f32 %v423, 0.18741608
      %v425 = vmul.f32 %v416, %v424
      %v426 = vadd.f32 %v425, 1.1283791
      %v427 = vmul.f32 %v357, %v426
      %v428 = vmul.f32 %v416, 3.8918573e-05
      %v429 = vadd.f32 %v428, 0.001143296
      %v430 = vmul.f32 %v416, %v429
      %v431 = vadd.f32 %v430, 0.014752088
      %v432 = vmul.f32 %v416, %v431
      %v433 = vadd.f32 %v432, 0.112945676
      %v434 = vmul.f32 %v416, %v433
      %v435 = vadd.f32 %v434, 0.4994258
      %v436 = vmul.f32 %v416, %v435
      %v437 = vadd.f32 %v436, 1.0
      %v438 = vrcp.pop %v437
      %v439 = vmul.f32 %v437, %v438
      %v440 = vsub.f32 1.0, %v439
      %v441 = vmul.f32 %v438, %v440
      %v442 = vadd.f32 %v438, %v441
      %vm443 = vweird.f32 %v437
      %vm444 = vweird.f32 %v438
      %vm445 = vmor %vm443, %vm444
      %v446 = vsel %vm445, %v438, %v442
      %v447 = vand.u32 2147483647, %v437
      %vm448 = vcmp.eq.f32.partialorder %v447, 8.507059e+37
      %v449 = vand.u32 %v437, 2147483648
      %v450 = vor.u32 1.1754944e-38, %v449
      %v451 = vsel %vm448, %v450, %v446
      %v452 = vmul.f32 %v427, %v451
      %v453 = vmin.f32 %v452, 1.0
      %v454 = vmax.f32 %v453, -1.0
      %v455 = vmul.f32 %v358, %v358
      %v456 = vmin.f32 16.0, %v455
      %v457 = vmul.f32 %v456, 2.1237322e-06
      %v458 = vadd.f32 %v457, 0.00028619796
      %v459 = vmul.f32 %v456, %v458
      %v460 = vadd.f32 %v459, 0.0036580483
      %v461 = vmul.f32 %v456, %v460
      %v462 = vadd.f32 %v461, 0.05243302
      %v463 = vmul.f32 %v456, %v462
      %v464 = vadd.f32 %v463, 0.18741608
      %v465 = vmul.f32 %v456, %v464
      %v466 = vadd.f32 %v465, 1.1283791
      %v467 = vmul.f32 %v358, %v466
      %v468 = vmul.f32 %v456, 3.8918573e-05
      %v469 = vadd.f32 %v468, 0.001143296
      %v470 = vmul.f32 %v456, %v469
      %v471 = vadd.f32 %v470, 0.014752088
      %v472 = vmul.f32 %v456, %v471
      %v473 = vadd.f32 %v472, 0.112945676
      %v474 = vmul.f32 %v456, %v473
      %v475 = vadd.f32 %v474, 0.4994258
      %v476 = vmul.f32 %v456, %v475
      %v477 = vadd.f32 %v476, 1.0
      %v478 = vrcp.pop %v477
      %v479 = vmul.f32 %v477, %v478
      %v480 = vsub.f32 1.0, %v479
      %v481 = vmul.f32 %v478, %v480
      %v482 = vadd.f32 %v478, %v481
      %vm483 = vweird.f32 %v477
      %vm484 = vweird.f32 %v478
      %vm485 = vmor %vm483, %vm484
      %v486 = vsel %vm485, %v478, %v482
      %v487 = vand.u32 2147483647, %v477
      %vm488 = vcmp.eq.f32.partialorder %v487, 8.507059e+37
      %v489 = vand.u32 %v477, 2147483648
      %v490 = vor.u32 1.1754944e-38, %v489
      %v491 = vsel %vm488, %v490, %v486
      %v492 = vmul.f32 %v467, %v491
      %v493 = vmin.f32 %v492, 1.0
      %v494 = vmax.f32 %v493, -1.0
      %v495 = vmul.f32 %v359, %v359
      %v496 = vmin.f32 16.0, %v495
      %v497 = vmul.f32 %v496, 2.1237322e-06
      %v498 = vadd.f32 %v497, 0.00028619796
      %v499 = vmul.f32 %v496, %v498
      %v500 = vadd.f32 %v499, 0.0036580483
      %v501 = vmul.f32 %v496, %v500
      %v502 = vadd.f32 %v501, 0.05243302
      %v503 = vmul.f32 %v496, %v502
      %v504 = vadd.f32 %v503, 0.18741608
      %v505 = vmul.f32 %v496, %v504
      %v506 = vadd.f32 %v505, 1.1283791
      %v507 = vmul.f32 %v359, %v506
      %v508 = vmul.f32 %v496, 3.8918573e-05
      %v509 = vadd.f32 %v508, 0.001143296
      %v510 = vmul.f32 %v496, %v509
      %v511 = vadd.f32 %v510, 0.014752088
      %v512 = vmul.f32 %v496, %v511
      %v513 = vadd.f32 %v512, 0.112945676
      %v514 = vmul.f32 %v496, %v513
      %v515 = vadd.f32 %v514, 0.4994258
      %v516 = vmul.f32 %v496, %v515
      %v517 = vadd.f32 %v516, 1.0
      %v518 = vrcp.pop %v517
      %v519 = vmul.f32 %v517, %v518
      %v520 = vsub.f32 1.0, %v519
      %v521 = vmul.f32 %v518, %v520
      %v522 = vadd.f32 %v518, %v521
      %vm523 = vweird.f32 %v517
      %vm524 = vweird.f32 %v518
      %vm525 = vmor %vm523, %vm524
      %v526 = vsel %vm525, %v518, %v522
      %v527 = vand.u32 2147483647, %v517
      %vm528 = vcmp.eq.f32.partialorder %v527, 8.507059e+37
      %v529 = vand.u32 %v517, 2147483648
      %v530 = vor.u32 1.1754944e-38, %v529
      %v531 = vsel %vm528, %v530, %v526
      %v532 = vmul.f32 %v507, %v531
      %v533 = vmin.f32 %v532, 1.0
      %v534 = vmax.f32 %v533, -1.0
      %v535 = vmul.f32 %v360, %v360
      %v536 = vmin.f32 16.0, %v535
      %v537 = vmul.f32 %v536, 2.1237322e-06
      %v538 = vadd.f32 %v537, 0.00028619796
      %v539 = vmul.f32 %v536, %v538
      %v540 = vadd.f32 %v539, 0.0036580483
      %v541 = vmul.f32 %v536, %v540
      %v542 = vadd.f32 %v541, 0.05243302
      %v543 = vmul.f32 %v536, %v542
      %v544 = vadd.f32 %v543, 0.18741608
      %v545 = vmul.f32 %v536, %v544
      %v546 = vadd.f32 %v545, 1.1283791
      %v547 = vmul.f32 %v360, %v546
      %v548 = vmul.f32 %v536, 3.8918573e-05
      %v549 = vadd.f32 %v548, 0.001143296
      %v550 = vmul.f32 %v536, %v549
      %v551 = vadd.f32 %v550, 0.014752088
      %v552 = vmul.f32 %v536, %v551
      %v553 = vadd.f32 %v552, 0.112945676
      %v554 = vmul.f32 %v536, %v553
      %v555 = vadd.f32 %v554, 0.4994258
      %v556 = vmul.f32 %v536, %v555
      %v557 = vadd.f32 %v556, 1.0
      %v558 = vrcp.pop %v557
      %v559 = vmul.f32 %v557, %v558
      %v560 = vsub.f32 1.0, %v559
      %v561 = vmul.f32 %v558, %v560
      %v562 = vadd.f32 %v558, %v561
      %vm563 = vweird.f32 %v557
      %vm564 = vweird.f32 %v558
      %vm565 = vmor %vm563, %vm564
      %v566 = vsel %vm565, %v558, %v562
      %v567 = vand.u32 2147483647, %v557
      %vm568 = vcmp.eq.f32.partialorder %v567, 8.507059e+37
      %v569 = vand.u32 %v557, 2147483648
      %v570 = vor.u32 1.1754944e-38, %v569
      %v571 = vsel %vm568, %v570, %v566
      %v572 = vmul.f32 %v547, %v571
      %v573 = vmin.f32 %v572, 1.0
      %v574 = vmax.f32 %v573, -1.0
      %v575 = vmul.f32 %v361, %v361
      %v576 = vmin.f32 16.0, %v575
      %v577 = vmul.f32 %v576, 2.1237322e-06
      %v578 = vadd.f32 %v577, 0.00028619796
      %v579 = vmul.f32 %v576, %v578
      %v580 = vadd.f32 %v579, 0.0036580483
      %v581 = vmul.f32 %v576, %v580
      %v582 = vadd.f32 %v581, 0.05243302
      %v583 = vmul.f32 %v576, %v582
      %v584 = vadd.f32 %v583, 0.18741608
      %v585 = vmul.f32 %v576, %v584
      %v586 = vadd.f32 %v585, 1.1283791
      %v587 = vmul.f32 %v361, %v586
      %v588 = vmul.f32 %v576, 3.8918573e-05
      %v589 = vadd.f32 %v588, 0.001143296
      %v590 = vmul.f32 %v576, %v589
      %v591 = vadd.f32 %v590, 0.014752088
      %v592 = vmul.f32 %v576, %v591
      %v593 = vadd.f32 %v592, 0.112945676
      %v594 = vmul.f32 %v576, %v593
      %v595 = vadd.f32 %v594, 0.4994258
      %v596 = vmul.f32 %v576, %v595
      %v597 = vadd.f32 %v596, 1.0
      %v598 = vrcp.pop %v597
      %v599 = vmul.f32 %v597, %v598
      %v600 = vsub.f32 1.0, %v599
      %v601 = vmul.f32 %v598, %v600
      %v602 = vadd.f32 %v598, %v601
      %vm603 = vweird.f32 %v597
      %vm604 = vweird.f32 %v598
      %vm605 = vmor %vm603, %vm604
      %v606 = vsel %vm605, %v598, %v602
      %v607 = vand.u32 2147483647, %v597
      %vm608 = vcmp.eq.f32.partialorder %v607, 8.507059e+37
      %v609 = vand.u32 %v597, 2147483648
      %v610 = vor.u32 1.1754944e-38, %v609
      %v611 = vsel %vm608, %v610, %v606
      %v612 = vmul.f32 %v587, %v611
      %v613 = vmin.f32 %v612, 1.0
      %v614 = vmax.f32 %v613, -1.0
      %v615 = vmul.f32 %v362, %v362
      %v616 = vmin.f32 16.0, %v615
      %v617 = vmul.f32 %v616, 2.1237322e-06
      %v618 = vadd.f32 %v617, 0.00028619796
      %v619 = vmul.f32 %v616, %v618
      %v620 = vadd.f32 %v619, 0.0036580483
      %v621 = vmul.f32 %v616, %v620
      %v622 = vadd.f32 %v621, 0.05243302
      %v623 = vmul.f32 %v616, %v622
      %v624 = vadd.f32 %v623, 0.18741608
      %v625 = vmul.f32 %v616, %v624
      %v626 = vadd.f32 %v625, 1.1283791
      %v627 = vmul.f32 %v362, %v626
      %v628 = vmul.f32 %v616, 3.8918573e-05
      %v629 = vadd.f32 %v628, 0.001143296
      %v630 = vmul.f32 %v616, %v629
      %v631 = vadd.f32 %v630, 0.014752088
      %v632 = vmul.f32 %v616, %v631
      %v633 = vadd.f32 %v632, 0.112945676
      %v634 = vmul.f32 %v616, %v633
      %v635 = vadd.f32 %v634, 0.4994258
      %v636 = vmul.f32 %v616, %v635
      %v637 = vadd.f32 %v636, 1.0
      %v638 = vrcp.pop %v637
      %v639 = vmul.f32 %v637, %v638
      %v640 = vsub.f32 1.0, %v639
      %v641 = vmul.f32 %v638, %v640
      %v642 = vadd.f32 %v638, %v641
      %vm643 = vweird.f32 %v637
      %vm644 = vweird.f32 %v638
      %vm645 = vmor %vm643, %vm644
      %v646 = vsel %vm645, %v638, %v642
      %v647 = vand.u32 2147483647, %v637
      %vm648 = vcmp.eq.f32.partialorder %v647, 8.507059e+37
      %v649 = vand.u32 %v637, 2147483648
      %v650 = vor.u32 1.1754944e-38, %v649
      %v651 = vsel %vm648, %v650, %v646
      %v652 = vmul.f32 %v627, %v651
      %v653 = vmin.f32 %v652, 1.0
      %v654 = vmax.f32 %v653, -1.0
      %v655 = vmul.f32 %v363, %v363
      %v656 = vmin.f32 16.0, %v655
      %v657 = vmul.f32 %v656, 2.1237322e-06
      %v658 = vadd.f32 %v657, 0.00028619796
      %v659 = vmul.f32 %v656, %v658
      %v660 = vadd.f32 %v659, 0.0036580483
      %v661 = vmul.f32 %v656, %v660
      %v662 = vadd.f32 %v661, 0.05243302
      %v663 = vmul.f32 %v656, %v662
      %v664 = vadd.f32 %v663, 0.18741608
      %v665 = vmul.f32 %v656, %v664
      %v666 = vadd.f32 %v665, 1.1283791
      %v667 = vmul.f32 %v363, %v666
      %v668 = vmul.f32 %v656, 3.8918573e-05
      %v669 = vadd.f32 %v668, 0.001143296
      %v670 = vmul.f32 %v656, %v669
      %v671 = vadd.f32 %v670, 0.014752088
      %v672 = vmul.f32 %v656, %v671
      %v673 = vadd.f32 %v672, 0.112945676
      %v674 = vmul.f32 %v656, %v673
      %v675 = vadd.f32 %v674, 0.4994258
      %v676 = vmul.f32 %v656, %v675
      %v677 = vadd.f32 %v676, 1.0
      %v678 = vrcp.pop %v677
      %v679 = vmul.f32 %v677, %v678
      %v680 = vsub.f32 1.0, %v679
      %v681 = vmul.f32 %v678, %v680
      %v682 = vadd.f32 %v678, %v681
      %vm683 = vweird.f32 %v677
      %vm684 = vweird.f32 %v678
      %vm685 = vmor %vm683, %vm684
      %v686 = vsel %vm685, %v678, %v682
      %v687 = vand.u32 2147483647, %v677
      %vm688 = vcmp.eq.f32.partialorder %v687, 8.507059e+37
      %v689 = vand.u32 %v677, 2147483648
      %v690 = vor.u32 1.1754944e-38, %v689
      %v691 = vsel %vm688, %v690, %v686
      %v692 = vmul.f32 %v667, %v691
      %v693 = vmin.f32 %v692, 1.0
      %v694 = vmax.f32 %v693, -1.0
      %v695 = vmul.f32 %v364, %v364
      %v696 = vmin.f32 16.0, %v695
      %v697 = vmul.f32 %v696, 2.1237322e-06
      %v698 = vadd.f32 %v697, 0.00028619796
      %v699 = vmul.f32 %v696, %v698
      %v700 = vadd.f32 %v699, 0.0036580483
      %v701 = vmul.f32 %v696, %v700
      %v702 = vadd.f32 %v701, 0.05243302
      %v703 = vmul.f32 %v696, %v702
      %v704 = vadd.f32 %v703, 0.18741608
      %v705 = vmul.f32 %v696, %v704
      %v706 = vadd.f32 %v705, 1.1283791
      %v707 = vmul.f32 %v364, %v706
      %v708 = vmul.f32 %v696, 3.8918573e-05
      %v709 = vadd.f32 %v708, 0.001143296
      %v710 = vmul.f32 %v696, %v709
      %v711 = vadd.f32 %v710, 0.014752088
      %v712 = vmul.f32 %v696, %v711
      %v713 = vadd.f32 %v712, 0.112945676
      %v714 = vmul.f32 %v696, %v713
      %v715 = vadd.f32 %v714, 0.4994258
      %v716 = vmul.f32 %v696, %v715
      %v717 = vadd.f32 %v716, 1.0
      %v718 = vrcp.pop %v717
      %v719 = vmul.f32 %v717, %v718
      %v720 = vsub.f32 1.0, %v719
      %v721 = vmul.f32 %v718, %v720
      %v722 = vadd.f32 %v718, %v721
      %vm723 = vweird.f32 %v717
      %vm724 = vweird.f32 %v718
      %vm725 = vmor %vm723, %vm724
      %v726 = vsel %vm725, %v718, %v722
      %v727 = vand.u32 2147483647, %v717
      %vm728 = vcmp.eq.f32.partialorder %v727, 8.507059e+37
      %v729 = vand.u32 %v717, 2147483648
      %v730 = vor.u32 1.1754944e-38, %v729
      %v731 = vsel %vm728, %v730, %v726
      %v732 = vmul.f32 %v707, %v731
      %v733 = vmin.f32 %v732, 1.0
      %v734 = vmax.f32 %v733, -1.0
      %v735 = vmul.f32 %v365, %v365
      %v736 = vmin.f32 16.0, %v735
      %v737 = vmul.f32 %v736, 2.1237322e-06
      %v738 = vadd.f32 %v737, 0.00028619796
      %v739 = vmul.f32 %v736, %v738
      %v740 = vadd.f32 %v739, 0.0036580483
      %v741 = vmul.f32 %v736, %v740
      %v742 = vadd.f32 %v741, 0.05243302
      %v743 = vmul.f32 %v736, %v742
      %v744 = vadd.f32 %v743, 0.18741608
      %v745 = vmul.f32 %v736, %v744
      %v746 = vadd.f32 %v745, 1.1283791
      %v747 = vmul.f32 %v365, %v746
      %v748 = vmul.f32 %v736, 3.8918573e-05
      %v749 = vadd.f32 %v748, 0.001143296
      %v750 = vmul.f32 %v736, %v749
      %v751 = vadd.f32 %v750, 0.014752088
      %v752 = vmul.f32 %v736, %v751
      %v753 = vadd.f32 %v752, 0.112945676
      %v754 = vmul.f32 %v736, %v753
      %v755 = vadd.f32 %v754, 0.4994258
      %v756 = vmul.f32 %v736, %v755
      %v757 = vadd.f32 %v756, 1.0
      %v758 = vrcp.pop %v757
      %v759 = vmul.f32 %v757, %v758
      %v760 = vsub.f32 1.0, %v759
      %v761 = vmul.f32 %v758, %v760
      %v762 = vadd.f32 %v758, %v761
      %vm763 = vweird.f32 %v757
      %vm764 = vweird.f32 %v758
      %vm765 = vmor %vm763, %vm764
      %v766 = vsel %vm765, %v758, %v762
      %v767 = vand.u32 2147483647, %v757
      %vm768 = vcmp.eq.f32.partialorder %v767, 8.507059e+37
      %v769 = vand.u32 %v757, 2147483648
      %v770 = vor.u32 1.1754944e-38, %v769
      %v771 = vsel %vm768, %v770, %v766
      %v772 = vmul.f32 %v747, %v771
      %v773 = vmin.f32 %v772, 1.0
      %v774 = vmax.f32 %v773, -1.0
      %v775 = vmul.f32 %v366, %v366
      %v776 = vmin.f32 16.0, %v775
      %v777 = vmul.f32 %v776, 2.1237322e-06
      %v778 = vadd.f32 %v777, 0.00028619796
      %v779 = vmul.f32 %v776, %v778
      %v780 = vadd.f32 %v779, 0.0036580483
      %v781 = vmul.f32 %v776, %v780
      %v782 = vadd.f32 %v781, 0.05243302
      %v783 = vmul.f32 %v776, %v782
      %v784 = vadd.f32 %v783, 0.18741608
      %v785 = vmul.f32 %v776, %v784
      %v786 = vadd.f32 %v785, 1.1283791
      %v787 = vmul.f32 %v366, %v786
      %v788 = vmul.f32 %v776, 3.8918573e-05
      %v789 = vadd.f32 %v788, 0.001143296
      %v790 = vmul.f32 %v776, %v789
      %v791 = vadd.f32 %v790, 0.014752088
      %v792 = vmul.f32 %v776, %v791
      %v793 = vadd.f32 %v792, 0.112945676
      %v794 = vmul.f32 %v776, %v793
      %v795 = vadd.f32 %v794, 0.4994258
      %v796 = vmul.f32 %v776, %v795
      %v797 = vadd.f32 %v796, 1.0
      %v798 = vrcp.pop %v797
      %v799 = vmul.f32 %v797, %v798
      %v800 = vsub.f32 1.0, %v799
      %v801 = vmul.f32 %v798, %v800
      %v802 = vadd.f32 %v798, %v801
      %vm803 = vweird.f32 %v797
      %vm804 = vweird.f32 %v798
      %vm805 = vmor %vm803, %vm804
      %v806 = vsel %vm805, %v798, %v802
      %v807 = vand.u32 2147483647, %v797
      %vm808 = vcmp.eq.f32.partialorder %v807, 8.507059e+37
      %v809 = vand.u32 %v797, 2147483648
      %v810 = vor.u32 1.1754944e-38, %v809
      %v811 = vsel %vm808, %v810, %v806
      %v812 = vmul.f32 %v787, %v811
      %v813 = vmin.f32 %v812, 1.0
      %v814 = vmax.f32 %v813, -1.0
      %v815 = vmul.f32 %v367, %v367
      %v816 = vmin.f32 16.0, %v815
      %v817 = vmul.f32 %v816, 2.1237322e-06
      %v818 = vadd.f32 %v817, 0.00028619796
      %v819 = vmul.f32 %v816, %v818
      %v820 = vadd.f32 %v819, 0.0036580483
      %v821 = vmul.f32 %v816, %v820
      %v822 = vadd.f32 %v821, 0.05243302
      %v823 = vmul.f32 %v816, %v822
      %v824 = vadd.f32 %v823, 0.18741608
      %v825 = vmul.f32 %v816, %v824
      %v826 = vadd.f32 %v825, 1.1283791
      %v827 = vmul.f32 %v367, %v826
      %v828 = vmul.f32 %v816, 3.8918573e-05
      %v829 = vadd.f32 %v828, 0.001143296
      %v830 = vmul.f32 %v816, %v829
      %v831 = vadd.f32 %v830, 0.014752088
      %v832 = vmul.f32 %v816, %v831
      %v833 = vadd.f32 %v832, 0.112945676
      %v834 = vmul.f32 %v816, %v833
      %v835 = vadd.f32 %v834, 0.4994258
      %v836 = vmul.f32 %v816, %v835
      %v837 = vadd.f32 %v836, 1.0
      %v838 = vrcp.pop %v837
      %v839 = vmul.f32 %v837, %v838
      %v840 = vsub.f32 1.0, %v839
      %v841 = vmul.f32 %v838, %v840
      %v842 = vadd.f32 %v838, %v841
      %vm843 = vweird.f32 %v837
      %vm844 = vweird.f32 %v838
      %vm845 = vmor %vm843, %vm844
      %v846 = vsel %vm845, %v838, %v842
      %v847 = vand.u32 2147483647, %v837
      %vm848 = vcmp.eq.f32.partialorder %v847, 8.507059e+37
      %v849 = vand.u32 %v837, 2147483648
      %v850 = vor.u32 1.1754944e-38, %v849
      %v851 = vsel %vm848, %v850, %v846
      %v852 = vmul.f32 %v827, %v851
      %v853 = vmin.f32 %v852, 1.0
      %v854 = vmax.f32 %v853, -1.0
      %v855 = vmul.f32 %v368, %v368
      %v856 = vmin.f32 16.0, %v855
      %v857 = vmul.f32 %v856, 2.1237322e-06
      %v858 = vadd.f32 %v857, 0.00028619796
      %v859 = vmul.f32 %v856, %v858
      %v860 = vadd.f32 %v859, 0.0036580483
      %v861 = vmul.f32 %v856, %v860
      %v862 = vadd.f32 %v861, 0.05243302
      %v863 = vmul.f32 %v856, %v862
      %v864 = vadd.f32 %v863, 0.18741608
      %v865 = vmul.f32 %v856, %v864
      %v866 = vadd.f32 %v865, 1.1283791
      %v867 = vmul.f32 %v368, %v866
      %v868 = vmul.f32 %v856, 3.8918573e-05
      %v869 = vadd.f32 %v868, 0.001143296
      %v870 = vmul.f32 %v856, %v869
      %v871 = vadd.f32 %v870, 0.014752088
      %v872 = vmul.f32 %v856, %v871
      %v873 = vadd.f32 %v872, 0.112945676
      %v874 = vmul.f32 %v856, %v873
      %v875 = vadd.f32 %v874, 0.4994258
      %v876 = vmul.f32 %v856, %v875
      %v877 = vadd.f32 %v876, 1.0
      %v878 = vrcp.pop %v877
      %v879 = vmul.f32 %v877, %v878
      %v880 = vsub.f32 1.0, %v879
      %v881 = vmul.f32 %v878, %v880
      %v882 = vadd.f32 %v878, %v881
      %vm883 = vweird.f32 %v877
      %vm884 = vweird.f32 %v878
      %vm885 = vmor %vm883, %vm884
      %v886 = vsel %vm885, %v878, %v882
      %v887 = vand.u32 2147483647, %v877
      %vm888 = vcmp.eq.f32.partialorder %v887, 8.507059e+37
      %v889 = vand.u32 %v877, 2147483648
      %v890 = vor.u32 1.1754944e-38, %v889
      %v891 = vsel %vm888, %v890, %v886
      %v892 = vmul.f32 %v867, %v891
      %v893 = vmin.f32 %v892, 1.0
      %v894 = vmax.f32 %v893, -1.0
      %v895 = vmul.f32 %v369, %v369
      %v896 = vmin.f32 16.0, %v895
      %v897 = vmul.f32 %v896, 2.1237322e-06
      %v898 = vadd.f32 %v897, 0.00028619796
      %v899 = vmul.f32 %v896, %v898
      %v900 = vadd.f32 %v899, 0.0036580483
      %v901 = vmul.f32 %v896, %v900
      %v902 = vadd.f32 %v901, 0.05243302
      %v903 = vmul.f32 %v896, %v902
      %v904 = vadd.f32 %v903, 0.18741608
      %v905 = vmul.f32 %v896, %v904
      %v906 = vadd.f32 %v905, 1.1283791
      %v907 = vmul.f32 %v369, %v906
      %v908 = vmul.f32 %v896, 3.8918573e-05
      %v909 = vadd.f32 %v908, 0.001143296
      %v910 = vmul.f32 %v896, %v909
      %v911 = vadd.f32 %v910, 0.014752088
      %v912 = vmul.f32 %v896, %v911
      %v913 = vadd.f32 %v912, 0.112945676
      %v914 = vmul.f32 %v896, %v913
      %v915 = vadd.f32 %v914, 0.4994258
      %v916 = vmul.f32 %v896, %v915
      %v917 = vadd.f32 %v916, 1.0
      %v918 = vrcp.pop %v917
      %v919 = vmul.f32 %v917, %v918
      %v920 = vsub.f32 1.0, %v919
      %v921 = vmul.f32 %v918, %v920
      %v922 = vadd.f32 %v918, %v921
      %vm923 = vweird.f32 %v917
      %vm924 = vweird.f32 %v918
      %vm925 = vmor %vm923, %vm924
      %v926 = vsel %vm925, %v918, %v922
      %v927 = vand.u32 2147483647, %v917
      %vm928 = vcmp.eq.f32.partialorder %v927, 8.507059e+37
      %v929 = vand.u32 %v917, 2147483648
      %v930 = vor.u32 1.1754944e-38, %v929
      %v931 = vsel %vm928, %v930, %v926
      %v932 = vmul.f32 %v907, %v931
      %v933 = vmin.f32 %v932, 1.0
      %v934 = vmax.f32 %v933, -1.0
      %v935 = vmul.f32 %v370, %v370
      %v936 = vmin.f32 16.0, %v935
      %v937 = vmul.f32 %v936, 2.1237322e-06
      %v938 = vadd.f32 %v937, 0.00028619796
      %v939 = vmul.f32 %v936, %v938
      %v940 = vadd.f32 %v939, 0.0036580483
      %v941 = vmul.f32 %v936, %v940
      %v942 = vadd.f32 %v941, 0.05243302
      %v943 = vmul.f32 %v936, %v942
      %v944 = vadd.f32 %v943, 0.18741608
      %v945 = vmul.f32 %v936, %v944
      %v946 = vadd.f32 %v945, 1.1283791
      %v947 = vmul.f32 %v370, %v946
      %v948 = vmul.f32 %v936, 3.8918573e-05
      %v949 = vadd.f32 %v948, 0.001143296
      %v950 = vmul.f32 %v936, %v949
      %v951 = vadd.f32 %v950, 0.014752088
      %v952 = vmul.f32 %v936, %v951
      %v953 = vadd.f32 %v952, 0.112945676
      %v954 = vmul.f32 %v936, %v953
      %v955 = vadd.f32 %v954, 0.4994258
      %v956 = vmul.f32 %v936, %v955
      %v957 = vadd.f32 %v956, 1.0
      %v958 = vrcp.pop %v957
      %v959 = vmul.f32 %v957, %v958
      %v960 = vsub.f32 1.0, %v959
      %v961 = vmul.f32 %v958, %v960
      %v962 = vadd.f32 %v958, %v961
      %vm963 = vweird.f32 %v957
      %vm964 = vweird.f32 %v958
      %vm965 = vmor %vm963, %vm964
      %v966 = vsel %vm965, %v958, %v962
      %v967 = vand.u32 2147483647, %v957
      %vm968 = vcmp.eq.f32.partialorder %v967, 8.507059e+37
      %v969 = vand.u32 %v957, 2147483648
      %v970 = vor.u32 1.1754944e-38, %v969
      %v971 = vsel %vm968, %v970, %v966
      %v972 = vmul.f32 %v947, %v971
      %v973 = vmin.f32 %v972, 1.0
      %v974 = vmax.f32 %v973, -1.0
      %v975 = vmul.f32 %v371, %v371
      %v976 = vmin.f32 16.0, %v975
      %v977 = vmul.f32 %v976, 2.1237322e-06
      %v978 = vadd.f32 %v977, 0.00028619796
      %v979 = vmul.f32 %v976, %v978
      %v980 = vadd.f32 %v979, 0.0036580483
      %v981 = vmul.f32 %v976, %v980
      %v982 = vadd.f32 %v981, 0.05243302
      %v983 = vmul.f32 %v976, %v982
      %v984 = vadd.f32 %v983, 0.18741608
      %v985 = vmul.f32 %v976, %v984
      %v986 = vadd.f32 %v985, 1.1283791
      %v987 = vmul.f32 %v371, %v986
      %v988 = vmul.f32 %v976, 3.8918573e-05
      %v989 = vadd.f32 %v988, 0.001143296
      %v990 = vmul.f32 %v976, %v989
      %v991 = vadd.f32 %v990, 0.014752088
      %v992 = vmul.f32 %v976, %v991
      %v993 = vadd.f32 %v992, 0.112945676
      %v994 = vmul.f32 %v976, %v993
      %v995 = vadd.f32 %v994, 0.4994258
      %v996 = vmul.f32 %v976, %v995
      %v997 = vadd.f32 %v996, 1.0
      %v998 = vrcp.pop %v997
      %v999 = vmul.f32 %v997, %v998
      %v1000 = vsub.f32 1.0, %v999
      %v1001 = vmul.f32 %v998, %v1000
      %v1002 = vadd.f32 %v998, %v1001
      %vm1003 = vweird.f32 %v997
      %vm1004 = vweird.f32 %v998
      %vm1005 = vmor %vm1003, %vm1004
      %v1006 = vsel %vm1005, %v998, %v1002
      %v1007 = vand.u32 2147483647, %v997
      %vm1008 = vcmp.eq.f32.partialorder %v1007, 8.507059e+37
      %v1009 = vand.u32 %v997, 2147483648
      %v1010 = vor.u32 1.1754944e-38, %v1009
      %v1011 = vsel %vm1008, %v1010, %v1006
      %v1012 = vmul.f32 %v987, %v1011
      %v1013 = vmin.f32 %v1012, 1.0
      %v1014 = vmax.f32 %v1013, -1.0
      %v1015 = vmul.f32 %v372, %v372
      %v1016 = vmin.f32 16.0, %v1015
      %v1017 = vmul.f32 %v1016, 2.1237322e-06
      %v1018 = vadd.f32 %v1017, 0.00028619796
      %v1019 = vmul.f32 %v1016, %v1018
      %v1020 = vadd.f32 %v1019, 0.0036580483
      %v1021 = vmul.f32 %v1016, %v1020
      %v1022 = vadd.f32 %v1021, 0.05243302
      %v1023 = vmul.f32 %v1016, %v1022
      %v1024 = vadd.f32 %v1023, 0.18741608
      %v1025 = vmul.f32 %v1016, %v1024
      %v1026 = vadd.f32 %v1025, 1.1283791
      %v1027 = vmul.f32 %v372, %v1026
      %v1028 = vmul.f32 %v1016, 3.8918573e-05
      %v1029 = vadd.f32 %v1028, 0.001143296
      %v1030 = vmul.f32 %v1016, %v1029
      %v1031 = vadd.f32 %v1030, 0.014752088
      %v1032 = vmul.f32 %v1016, %v1031
      %v1033 = vadd.f32 %v1032, 0.112945676
      %v1034 = vmul.f32 %v1016, %v1033
      %v1035 = vadd.f32 %v1034, 0.4994258
      %v1036 = vmul.f32 %v1016, %v1035
      %v1037 = vadd.f32 %v1036, 1.0
      %v1038 = vrcp.pop %v1037
      %v1039 = vmul.f32 %v1037, %v1038
      %v1040 = vsub.f32 1.0, %v1039
      %v1041 = vmul.f32 %v1038, %v1040
      %v1042 = vadd.f32 %v1038, %v1041
      %vm1043 = vweird.f32 %v1037
      %vm1044 = vweird.f32 %v1038
      %vm1045 = vmor %vm1043, %vm1044
      %v1046 = vsel %vm1045, %v1038, %v1042
      %v1047 = vand.u32 2147483647, %v1037
      %vm1048 = vcmp.eq.f32.partialorder %v1047, 8.507059e+37
      %v1049 = vand.u32 %v1037, 2147483648
      %v1050 = vor.u32 1.1754944e-38, %v1049
      %v1051 = vsel %vm1048, %v1050, %v1046
      %v1052 = vmul.f32 %v1027, %v1051
      %v1053 = vmin.f32 %v1052, 1.0
      %v1054 = vmax.f32 %v1053, -1.0
      %v1055 = vmul.f32 %v373, %v373
      %v1056 = vmin.f32 16.0, %v1055
      %v1057 = vmul.f32 %v1056, 2.1237322e-06
      %v1058 = vadd.f32 %v1057, 0.00028619796
      %v1059 = vmul.f32 %v1056, %v1058
      %v1060 = vadd.f32 %v1059, 0.0036580483
      %v1061 = vmul.f32 %v1056, %v1060
      %v1062 = vadd.f32 %v1061, 0.05243302
      %v1063 = vmul.f32 %v1056, %v1062
      %v1064 = vadd.f32 %v1063, 0.18741608
      %v1065 = vmul.f32 %v1056, %v1064
      %v1066 = vadd.f32 %v1065, 1.1283791
      %v1067 = vmul.f32 %v373, %v1066
      %v1068 = vmul.f32 %v1056, 3.8918573e-05
      %v1069 = vadd.f32 %v1068, 0.001143296
      %v1070 = vmul.f32 %v1056, %v1069
      %v1071 = vadd.f32 %v1070, 0.014752088
      %v1072 = vmul.f32 %v1056, %v1071
      %v1073 = vadd.f32 %v1072, 0.112945676
      %v1074 = vmul.f32 %v1056, %v1073
      %v1075 = vadd.f32 %v1074, 0.4994258
      %v1076 = vmul.f32 %v1056, %v1075
      %v1077 = vadd.f32 %v1076, 1.0
      %v1078 = vrcp.pop %v1077
      %v1079 = vmul.f32 %v1077, %v1078
      %v1080 = vsub.f32 1.0, %v1079
      %v1081 = vmul.f32 %v1078, %v1080
      %v1082 = vadd.f32 %v1078, %v1081
      %vm1083 = vweird.f32 %v1077
      %vm1084 = vweird.f32 %v1078
      %vm1085 = vmor %vm1083, %vm1084
      %v1086 = vsel %vm1085, %v1078, %v1082
      %v1087 = vand.u32 2147483647, %v1077
      %vm1088 = vcmp.eq.f32.partialorder %v1087, 8.507059e+37
      %v1089 = vand.u32 %v1077, 2147483648
      %v1090 = vor.u32 1.1754944e-38, %v1089
      %v1091 = vsel %vm1088, %v1090, %v1086
      %v1092 = vmul.f32 %v1067, %v1091
      %v1093 = vmin.f32 %v1092, 1.0
      %v1094 = vmax.f32 %v1093, -1.0
      %v1095 = vmul.f32 %v374, %v374
      %v1096 = vmin.f32 16.0, %v1095
      %v1097 = vmul.f32 %v1096, 2.1237322e-06
      %v1098 = vadd.f32 %v1097, 0.00028619796
      %v1099 = vmul.f32 %v1096, %v1098
      %v1100 = vadd.f32 %v1099, 0.0036580483
      %v1101 = vmul.f32 %v1096, %v1100
      %v1102 = vadd.f32 %v1101, 0.05243302
      %v1103 = vmul.f32 %v1096, %v1102
      %v1104 = vadd.f32 %v1103, 0.18741608
      %v1105 = vmul.f32 %v1096, %v1104
      %v1106 = vadd.f32 %v1105, 1.1283791
      %v1107 = vmul.f32 %v374, %v1106
      %v1108 = vmul.f32 %v1096, 3.8918573e-05
      %v1109 = vadd.f32 %v1108, 0.001143296
      %v1110 = vmul.f32 %v1096, %v1109
      %v1111 = vadd.f32 %v1110, 0.014752088
      %v1112 = vmul.f32 %v1096, %v1111
      %v1113 = vadd.f32 %v1112, 0.112945676
      %v1114 = vmul.f32 %v1096, %v1113
      %v1115 = vadd.f32 %v1114, 0.4994258
      %v1116 = vmul.f32 %v1096, %v1115
      %v1117 = vadd.f32 %v1116, 1.0
      %v1118 = vrcp.pop %v1117
      %v1119 = vmul.f32 %v1117, %v1118
      %v1120 = vsub.f32 1.0, %v1119
      %v1121 = vmul.f32 %v1118, %v1120
      %v1122 = vadd.f32 %v1118, %v1121
      %vm1123 = vweird.f32 %v1117
      %vm1124 = vweird.f32 %v1118
      %vm1125 = vmor %vm1123, %vm1124
      %v1126 = vsel %vm1125, %v1118, %v1122
      %v1127 = vand.u32 2147483647, %v1117
      %vm1128 = vcmp.eq.f32.partialorder %v1127, 8.507059e+37
      %v1129 = vand.u32 %v1117, 2147483648
      %v1130 = vor.u32 1.1754944e-38, %v1129
      %v1131 = vsel %vm1128, %v1130, %v1126
      %v1132 = vmul.f32 %v1107, %v1131
      %v1133 = vmin.f32 %v1132, 1.0
      %v1134 = vmax.f32 %v1133, -1.0
      %v1135 = vadd.f32 %v414, 1.0
      %v1136 = vadd.f32 %v454, 1.0
      %v1137 = vadd.f32 %v494, 1.0
      %v1138 = vadd.f32 %v534, 1.0
      %v1139 = vadd.f32 %v574, 1.0
      %v1140 = vadd.f32 %v614, 1.0
      %v1141 = vadd.f32 %v654, 1.0
      %v1142 = vadd.f32 %v694, 1.0
      %v1143 = vadd.f32 %v734, 1.0
      %v1144 = vadd.f32 %v774, 1.0
      %v1145 = vadd.f32 %v814, 1.0
      %v1146 = vadd.f32 %v854, 1.0
      %v1147 = vadd.f32 %v894, 1.0
      %v1148 = vadd.f32 %v934, 1.0
      %v1149 = vadd.f32 %v974, 1.0
      %v1150 = vadd.f32 %v1014, 1.0
      %v1151 = vadd.f32 %v1054, 1.0
      %v1152 = vadd.f32 %v1094, 1.0
      %v1153 = vadd.f32 %v1134, 1.0
      %v1154 = vmul.f32 %v337, %v1135
      %v1155 = vmul.f32 %v338, %v1136
      %v1156 = vmul.f32 %v339, %v1137
      %v1157 = vmul.f32 %v340, %v1138
      %v1158 = vmul.f32 %v341, %v1139
      %v1159 = vmul.f32 %v342, %v1140
      %v1160 = vmul.f32 %v343, %v1141
      %v1161 = vmul.f32 %v344, %v1142
      %v1162 = vmul.f32 %v345, %v1143
      %v1163 = vmul.f32 %v346, %v1144
      %v1164 = vmul.f32 %v347, %v1145
      %v1165 = vmul.f32 %v348, %v1146
      %v1166 = vmul.f32 %v349, %v1147
      %v1167 = vmul.f32 %v350, %v1148
      %v1168 = vmul.f32 %v351, %v1149
      %v1169 = vmul.f32 %v352, %v1150
      %v1170 = vmul.f32 %v353, %v1151
      %v1171 = vmul.f32 %v354, %v1152
      %v1172 = vmul.f32 %v355, %v1153
      %v1173 = vld [vmem:[%s2] sm:$0xff]
      %v1174 = vld [vmem:[%s2 + $0x8] sm:$0xff]
      %v1175 = vld [vmem:[%s2 + $0x10] sm:$0xff]
      %v1176 = vld [vmem:[%s2 + $0x18] sm:$0xff]
      %v1177 = vld [vmem:[%s2 + $0x20] sm:$0xff]
      %v1178 = vld [vmem:[%s2 + $0x28] sm:$0xff]
      %v1179 = vld [vmem:[%s2 + $0x30] sm:$0xff]
      %v1180 = vld [vmem:[%s2 + $0x38] sm:$0xff]
      %v1181 = vld [vmem:[%s2 + $0x40] sm:$0xff]
      %v1182 = vld [vmem:[%s2 + $0x48] sm:$0xff]
      %v1183 = vld [vmem:[%s2 + $0x50] sm:$0xff]
      %v1184 = vld [vmem:[%s2 + $0x58] sm:$0xff]
      %v1185 = vld [vmem:[%s2 + $0x60] sm:$0xff]
      %v1186 = vld [vmem:[%s2 + $0x68] sm:$0xff]
      %v1187 = vld [vmem:[%s2 + $0x70] sm:$0xff]
      %v1188 = vld [vmem:[%s2 + $0x78] sm:$0xff]
      %1189 = vmatpush.msra.mxu0 %v1188
      %1190 = vmatpush.msra.mxu0 %v1187
      %1191 = vmatpush.msra.mxu0 %v1186
      %1192 = vmatpush.msra.mxu0 %v1185
      %1193 = vmatpush.msra.mxu0 %v1184
      %1194 = vmatpush.msra.mxu0 %v1183
      %1195 = vmatpush.msra.mxu0 %v1182
      %1196 = vmatpush.msra.mxu0 %v1181
      %1197 = vmatpush.msra.mxu0 %v1180
      %1198 = vmatpush.msra.mxu0 %v1179
      %1199 = vmatpush.msra.mxu0 %v1178
      %1200 = vmatpush.msra.mxu0 %v1177
      %1201 = vmatpush.msra.mxu0 %v1176
      %1202 = vmatpush.msra.mxu0 %v1175
      %1203 = vmatpush.msra.mxu0 %v1174
      %1204 = vmatpush.msra.mxu0 %v1173
      %1205 = vmatmul.f32.gmra.mxu0 %v1154
      %v1206 = vpop.f32.mrf.mxu0
      %v1207 = vadd.f32 0.0, %v1206
      %1208 = vmatmul.f32.gmra.mxu0 %v1155
      %v1209 = vpop.f32.mrf.mxu0
      %v1210 = vadd.f32 0.0, %v1209
      %1211 = vmatmul.f32.gmra.mxu0 %v1156
      %v1212 = vpop.f32.mrf.mxu0
      %v1213 = vadd.f32 0.0, %v1212
      %1214 = vmatmul.f32.gmra.mxu0 %v1157
      %v1215 = vpop.f32.mrf.mxu0
      %v1216 = vadd.f32 0.0, %v1215
      %1217 = vmatmul.f32.gmra.mxu0 %v1158
      %v1218 = vpop.f32.mrf.mxu0
      %v1219 = vadd.f32 0.0, %v1218
      %1220 = vmatmul.f32.gmra.mxu0 %v1159
      %v1221 = vpop.f32.mrf.mxu0
      %v1222 = vadd.f32 0.0, %v1221
      %1223 = vmatmul.f32.gmra.mxu0 %v1160
      %v1224 = vpop.f32.mrf.mxu0
      %v1225 = vadd.f32 0.0, %v1224
      %1226 = vmatmul.f32.gmra.mxu0 %v1161
      %v1227 = vpop.f32.mrf.mxu0
      %v1228 = vadd.f32 0.0, %v1227
      %1229 = vmatmul.f32.gmra.mxu0 %v1162
      %v1230 = vpop.f32.mrf.mxu0
      %v1231 = vadd.f32 0.0, %v1230
      %1232 = vmatmul.f32.gmra.mxu0 %v1163
      %v1233 = vpop.f32.mrf.mxu0
      %v1234 = vadd.f32 0.0, %v1233
      %1235 = vmatmul.f32.gmra.mxu0 %v1164
      %v1236 = vpop.f32.mrf.mxu0
      %v1237 = vadd.f32 0.0, %v1236
      %1238 = vmatmul.f32.gmra.mxu0 %v1165
      %v1239 = vpop.f32.mrf.mxu0
      %v1240 = vadd.f32 0.0, %v1239
      %1241 = vmatmul.f32.gmra.mxu0 %v1166
      %v1242 = vpop.f32.mrf.mxu0
      %v1243 = vadd.f32 0.0, %v1242
      %1244 = vmatmul.f32.gmra.mxu0 %v1167
      %v1245 = vpop.f32.mrf.mxu0
      %v1246 = vadd.f32 0.0, %v1245
      %1247 = vmatmul.f32.gmra.mxu0 %v1168
      %v1248 = vpop.f32.mrf.mxu0
      %v1249 = vadd.f32 0.0, %v1248
      %1250 = vmatmul.f32.gmra.mxu0 %v1169
      %v1251 = vpop.f32.mrf.mxu0
      %v1252 = vadd.f32 0.0, %v1251
      %1253 = vmatmul.f32.gmra.mxu0 %v1170
      %v1254 = vpop.f32.mrf.mxu0
      %v1255 = vadd.f32 0.0, %v1254
      %1256 = vmatmul.f32.gmra.mxu0 %v1171
      %v1257 = vpop.f32.mrf.mxu0
      %v1258 = vadd.f32 0.0, %v1257
      %1259 = vmatmul.f32.gmra.mxu0 %v1172
      %v1260 = vpop.f32.mrf.mxu0
      %v1261 = vadd.f32 0.0, %v1260
      %1262 = vdwg.mxu0
      %v1263 = vadd.f32 %v281, %v1207
      %v1264 = vadd.f32 %v284, %v1210
      %v1265 = vadd.f32 %v287, %v1213
      %v1266 = vadd.f32 %v290, %v1216
      %v1267 = vadd.f32 %v293, %v1219
      %v1268 = vadd.f32 %v296, %v1222
      %v1269 = vadd.f32 %v299, %v1225
      %v1270 = vadd.f32 %v302, %v1228
      %v1271 = vadd.f32 %v305, %v1231
      %v1272 = vadd.f32 %v308, %v1234
      %v1273 = vadd.f32 %v311, %v1237
      %v1274 = vadd.f32 %v314, %v1240
      %v1275 = vadd.f32 %v317, %v1243
      %v1276 = vadd.f32 %v320, %v1246
      %v1277 = vadd.f32 %v323, %v1249
      %v1278 = vadd.f32 %v326, %v1252
      %v1279 = vadd.f32 %v329, %v1255
      %v1280 = vadd.f32 %v332, %v1258
      %v1281 = vadd.f32 %v335, %v1261
      %1282 = vadd.xlane.f32.xlu0 %v1263
      %v1283 = vpop.xlane.xlu0 %1282
      %1284 = vadd.xlane.f32.xlu0 %v1264
      %v1285 = vpop.xlane.xlu0 %1284
      %1286 = vadd.xlane.f32.xlu0 %v1265
      %v1287 = vpop.xlane.xlu0 %1286
      %1288 = vadd.xlane.f32.xlu0 %v1266
      %v1289 = vpop.xlane.xlu0 %1288
      %1290 = vadd.xlane.f32.xlu0 %v1267
      %v1291 = vpop.xlane.xlu0 %1290
      %1292 = vadd.xlane.f32.xlu0 %v1268
      %v1293 = vpop.xlane.xlu0 %1292
      %1294 = vadd.xlane.f32.xlu0 %v1269
      %v1295 = vpop.xlane.xlu0 %1294
      %1296 = vadd.xlane.f32.xlu0 %v1270
      %v1297 = vpop.xlane.xlu0 %1296
      %1298 = vadd.xlane.f32.xlu0 %v1271
      %v1299 = vpop.xlane.xlu0 %1298
      %1300 = vadd.xlane.f32.xlu0 %v1272
      %v1301 = vpop.xlane.xlu0 %1300
      %1302 = vadd.xlane.f32.xlu0 %v1273
      %v1303 = vpop.xlane.xlu0 %1302
      %1304 = vadd.xlane.f32.xlu0 %v1274
      %v1305 = vpop.xlane.xlu0 %1304
      %1306 = vadd.xlane.f32.xlu0 %v1275
      %v1307 = vpop.xlane.xlu0 %1306
      %1308 = vadd.xlane.f32.xlu0 %v1276
      %v1309 = vpop.xlane.xlu0 %1308
      %1310 = vadd.xlane.f32.xlu0 %v1277
      %v1311 = vpop.xlane.xlu0 %1310
      %1312 = vadd.xlane.f32.xlu0 %v1278
      %v1313 = vpop.xlane.xlu0 %1312
      %1314 = vadd.xlane.f32.xlu0 %v1279
      %v1315 = vpop.xlane.xlu0 %1314
      %1316 = vadd.xlane.f32.xlu0 %v1280
      %v1317 = vpop.xlane.xlu0 %1316
      %1318 = vadd.xlane.f32.xlu0 %v1281
      %v1319 = vpop.xlane.xlu0 %1318
      %v1320 = vrcp.pop 128.0
      %v1321 = vmul.f32 128.0, %v1320
      %v1322 = vsub.f32 1.0, %v1321
      %v1323 = vmul.f32 %v1320, %v1322
      %v1324 = vadd.f32 %v1320, %v1323
      %vm1325 = vweird.f32 %v1320
      %v1326 = vsel %vm1325, %v1320, %v1324
      %v1327 = vmul.f32 %v1283, %v1326
      %v1328 = vmul.f32 %v1285, %v1326
      %v1329 = vmul.f32 %v1287, %v1326
      %v1330 = vmul.f32 %v1289, %v1326
      %v1331 = vmul.f32 %v1291, %v1326
      %v1332 = vmul.f32 %v1293, %v1326
      %v1333 = vmul.f32 %v1295, %v1326
      %v1334 = vmul.f32 %v1297, %v1326
      %v1335 = vmul.f32 %v1299, %v1326
      %v1336 = vmul.f32 %v1301, %v1326
      %v1337 = vmul.f32 %v1303, %v1326
      %v1338 = vmul.f32 %v1305, %v1326
      %v1339 = vmul.f32 %v1307, %v1326
      %v1340 = vmul.f32 %v1309, %v1326
      %v1341 = vmul.f32 %v1311, %v1326
      %v1342 = vmul.f32 %v1313, %v1326
      %v1343 = vmul.f32 %v1315, %v1326
      %v1344 = vmul.f32 %v1317, %v1326
      %v1345 = vmul.f32 %v1319, %v1326
      %v1346 = vsub.f32 %v1263, %v1327
      %v1347 = vsub.f32 %v1264, %v1328
      %v1348 = vsub.f32 %v1265, %v1329
      %v1349 = vsub.f32 %v1266, %v1330
      %v1350 = vsub.f32 %v1267, %v1331
      %v1351 = vsub.f32 %v1268, %v1332
      %v1352 = vsub.f32 %v1269, %v1333
      %v1353 = vsub.f32 %v1270, %v1334
      %v1354 = vsub.f32 %v1271, %v1335
      %v1355 = vsub.f32 %v1272, %v1336
      %v1356 = vsub.f32 %v1273, %v1337
      %v1357 = vsub.f32 %v1274, %v1338
      %v1358 = vsub.f32 %v1275, %v1339
      %v1359 = vsub.f32 %v1276, %v1340
      %v1360 = vsub.f32 %v1277, %v1341
      %v1361 = vsub.f32 %v1278, %v1342
      %v1362 = vsub.f32 %v1279, %v1343
      %v1363 = vsub.f32 %v1280, %v1344
      %v1364 = vsub.f32 %v1281, %v1345
      %v1365 = vmul.f32 %v1346, %v1346
      %v1366 = vmul.f32 %v1347, %v1347
      %v1367 = vmul.f32 %v1348, %v1348
      %v1368 = vmul.f32 %v1349, %v1349
      %v1369 = vmul.f32 %v1350, %v1350
      %v1370 = vmul.f32 %v1351, %v1351
      %v1371 = vmul.f32 %v1352, %v1352
      %v1372 = vmul.f32 %v1353, %v1353
      %v1373 = vmul.f32 %v1354, %v1354
      %v1374 = vmul.f32 %v1355, %v1355
      %v1375 = vmul.f32 %v1356, %v1356
      %v1376 = vmul.f32 %v1357, %v1357
      %v1377 = vmul.f32 %v1358, %v1358
      %v1378 = vmul.f32 %v1359, %v1359
      %v1379 = vmul.f32 %v1360, %v1360
      %v1380 = vmul.f32 %v1361, %v1361
      %v1381 = vmul.f32 %v1362, %v1362
      %v1382 = vmul.f32 %v1363, %v1363
      %v1383 = vmul.f32 %v1364, %v1364
      %1384 = vadd.xlane.f32.xlu0 %v1365
      %v1385 = vpop.xlane.xlu0 %1384
      %1386 = vadd.xlane.f32.xlu0 %v1366
      %v1387 = vpop.xlane.xlu0 %1386
      %1388 = vadd.xlane.f32.xlu0 %v1367
      %v1389 = vpop.xlane.xlu0 %1388
      %1390 = vadd.xlane.f32.xlu0 %v1368
      %v1391 = vpop.xlane.xlu0 %1390
      %1392 = vadd.xlane.f32.xlu0 %v1369
      %v1393 = vpop.xlane.xlu0 %1392
      %1394 = vadd.xlane.f32.xlu0 %v1370
      %v1395 = vpop.xlane.xlu0 %1394
      %1396 = vadd.xlane.f32.xlu0 %v1371
      %v1397 = vpop.xlane.xlu0 %1396
      %1398 = vadd.xlane.f32.xlu0 %v1372
      %v1399 = vpop.xlane.xlu0 %1398
      %1400 = vadd.xlane.f32.xlu0 %v1373
      %v1401 = vpop.xlane.xlu0 %1400
      %1402 = vadd.xlane.f32.xlu0 %v1374
      %v1403 = vpop.xlane.xlu0 %1402
      %1404 = vadd.xlane.f32.xlu0 %v1375
      %v1405 = vpop.xlane.xlu0 %1404
      %1406 = vadd.xlane.f32.xlu0 %v1376
      %v1407 = vpop.xlane.xlu0 %1406
      %1408 = vadd.xlane.f32.xlu0 %v1377
      %v1409 = vpop.xlane.xlu0 %1408
      %1410 = vadd.xlane.f32.xlu0 %v1378
      %v1411 = vpop.xlane.xlu0 %1410
      %1412 = vadd.xlane.f32.xlu0 %v1379
      %v1413 = vpop.xlane.xlu0 %1412
      %1414 = vadd.xlane.f32.xlu0 %v1380
      %v1415 = vpop.xlane.xlu0 %1414
      %1416 = vadd.xlane.f32.xlu0 %v1381
      %v1417 = vpop.xlane.xlu0 %1416
      %1418 = vadd.xlane.f32.xlu0 %v1382
      %v1419 = vpop.xlane.xlu0 %1418
      %1420 = vadd.xlane.f32.xlu0 %v1383
      %v1421 = vpop.xlane.xlu0 %1420
      %v1422 = vmul.f32 %v1385, %v1326
      %v1423 = vmul.f32 %v1387, %v1326
      %v1424 = vmul.f32 %v1389, %v1326
      %v1425 = vmul.f32 %v1391, %v1326
      %v1426 = vmul.f32 %v1393, %v1326
      %v1427 = vmul.f32 %v1395, %v1326
      %v1428 = vmul.f32 %v1397, %v1326
      %v1429 = vmul.f32 %v1399, %v1326
      %v1430 = vmul.f32 %v1401, %v1326
      %v1431 = vmul.f32 %v1403, %v1326
      %v1432 = vmul.f32 %v1405, %v1326
      %v1433 = vmul.f32 %v1407, %v1326
      %v1434 = vmul.f32 %v1409, %v1326
      %v1435 = vmul.f32 %v1411, %v1326
      %v1436 = vmul.f32 %v1413, %v1326
      %v1437 = vmul.f32 %v1415, %v1326
      %v1438 = vmul.f32 %v1417, %v1326
      %v1439 = vmul.f32 %v1419, %v1326
      %v1440 = vmul.f32 %v1421, %v1326
      %v1441 = vadd.f32 %v1422, 1e-05
      %v1442 = vadd.f32 %v1423, 1e-05
      %v1443 = vadd.f32 %v1424, 1e-05
      %v1444 = vadd.f32 %v1425, 1e-05
      %v1445 = vadd.f32 %v1426, 1e-05
      %v1446 = vadd.f32 %v1427, 1e-05
      %v1447 = vadd.f32 %v1428, 1e-05
      %v1448 = vadd.f32 %v1429, 1e-05
      %v1449 = vadd.f32 %v1430, 1e-05
      %v1450 = vadd.f32 %v1431, 1e-05
      %v1451 = vadd.f32 %v1432, 1e-05
      %v1452 = vadd.f32 %v1433, 1e-05
      %v1453 = vadd.f32 %v1434, 1e-05
      %v1454 = vadd.f32 %v1435, 1e-05
      %v1455 = vadd.f32 %v1436, 1e-05
      %v1456 = vadd.f32 %v1437, 1e-05
      %v1457 = vadd.f32 %v1438, 1e-05
      %v1458 = vadd.f32 %v1439, 1e-05
      %v1459 = vadd.f32 %v1440, 1e-05
      %v1460 = vrsqrt.pop %v1441
      %v1461 = vmul.f32 %v1460, %v1441
      %v1462 = vmul.f32 %v1461, %v1460
      %v1463 = vmul.f32 0.5, %v1462
      %v1464 = vsub.f32 1.5, %v1463
      %v1465 = vmul.f32 %v1460, %v1464
      %vm1466 = vweird.f32 %v1441
      %vm1467 = vweird.f32 %v1460
      %vm1468 = vmor %vm1466, %vm1467
      %v1469 = vsel %vm1468, %v1460, %v1465
      %v1470 = vrsqrt.pop %v1442
      %v1471 = vmul.f32 %v1470, %v1442
      %v1472 = vmul.f32 %v1471, %v1470
      %v1473 = vmul.f32 0.5, %v1472
      %v1474 = vsub.f32 1.5, %v1473
      %v1475 = vmul.f32 %v1470, %v1474
      %vm1476 = vweird.f32 %v1442
      %vm1477 = vweird.f32 %v1470
      %vm1478 = vmor %vm1476, %vm1477
      %v1479 = vsel %vm1478, %v1470, %v1475
      %v1480 = vrsqrt.pop %v1443
      %v1481 = vmul.f32 %v1480, %v1443
      %v1482 = vmul.f32 %v1481, %v1480
      %v1483 = vmul.f32 0.5, %v1482
      %v1484 = vsub.f32 1.5, %v1483
      %v1485 = vmul.f32 %v1480, %v1484
      %vm1486 = vweird.f32 %v1443
      %vm1487 = vweird.f32 %v1480
      %vm1488 = vmor %vm1486, %vm1487
      %v1489 = vsel %vm1488, %v1480, %v1485
      %v1490 = vrsqrt.pop %v1444
      %v1491 = vmul.f32 %v1490, %v1444
      %v1492 = vmul.f32 %v1491, %v1490
      %v1493 = vmul.f32 0.5, %v1492
      %v1494 = vsub.f32 1.5, %v1493
      %v1495 = vmul.f32 %v1490, %v1494
      %vm1496 = vweird.f32 %v1444
      %vm1497 = vweird.f32 %v1490
      %vm1498 = vmor %vm1496, %vm1497
      %v1499 = vsel %vm1498, %v1490, %v1495
      %v1500 = vrsqrt.pop %v1445
      %v1501 = vmul.f32 %v1500, %v1445
      %v1502 = vmul.f32 %v1501, %v1500
      %v1503 = vmul.f32 0.5, %v1502
      %v1504 = vsub.f32 1.5, %v1503
      %v1505 = vmul.f32 %v1500, %v1504
      %vm1506 = vweird.f32 %v1445
      %vm1507 = vweird.f32 %v1500
      %vm1508 = vmor %vm1506, %vm1507
      %v1509 = vsel %vm1508, %v1500, %v1505
      %v1510 = vrsqrt.pop %v1446
      %v1511 = vmul.f32 %v1510, %v1446
      %v1512 = vmul.f32 %v1511, %v1510
      %v1513 = vmul.f32 0.5, %v1512
      %v1514 = vsub.f32 1.5, %v1513
      %v1515 = vmul.f32 %v1510, %v1514
      %vm1516 = vweird.f32 %v1446
      %vm1517 = vweird.f32 %v1510
      %vm1518 = vmor %vm1516, %vm1517
      %v1519 = vsel %vm1518, %v1510, %v1515
      %v1520 = vrsqrt.pop %v1447
      %v1521 = vmul.f32 %v1520, %v1447
      %v1522 = vmul.f32 %v1521, %v1520
      %v1523 = vmul.f32 0.5, %v1522
      %v1524 = vsub.f32 1.5, %v1523
      %v1525 = vmul.f32 %v1520, %v1524
      %vm1526 = vweird.f32 %v1447
      %vm1527 = vweird.f32 %v1520
      %vm1528 = vmor %vm1526, %vm1527
      %v1529 = vsel %vm1528, %v1520, %v1525
      %v1530 = vrsqrt.pop %v1448
      %v1531 = vmul.f32 %v1530, %v1448
      %v1532 = vmul.f32 %v1531, %v1530
      %v1533 = vmul.f32 0.5, %v1532
      %v1534 = vsub.f32 1.5, %v1533
      %v1535 = vmul.f32 %v1530, %v1534
      %vm1536 = vweird.f32 %v1448
      %vm1537 = vweird.f32 %v1530
      %vm1538 = vmor %vm1536, %vm1537
      %v1539 = vsel %vm1538, %v1530, %v1535
      %v1540 = vrsqrt.pop %v1449
      %v1541 = vmul.f32 %v1540, %v1449
      %v1542 = vmul.f32 %v1541, %v1540
      %v1543 = vmul.f32 0.5, %v1542
      %v1544 = vsub.f32 1.5, %v1543
      %v1545 = vmul.f32 %v1540, %v1544
      %vm1546 = vweird.f32 %v1449
      %vm1547 = vweird.f32 %v1540
      %vm1548 = vmor %vm1546, %vm1547
      %v1549 = vsel %vm1548, %v1540, %v1545
      %v1550 = vrsqrt.pop %v1450
      %v1551 = vmul.f32 %v1550, %v1450
      %v1552 = vmul.f32 %v1551, %v1550
      %v1553 = vmul.f32 0.5, %v1552
      %v1554 = vsub.f32 1.5, %v1553
      %v1555 = vmul.f32 %v1550, %v1554
      %vm1556 = vweird.f32 %v1450
      %vm1557 = vweird.f32 %v1550
      %vm1558 = vmor %vm1556, %vm1557
      %v1559 = vsel %vm1558, %v1550, %v1555
      %v1560 = vrsqrt.pop %v1451
      %v1561 = vmul.f32 %v1560, %v1451
      %v1562 = vmul.f32 %v1561, %v1560
      %v1563 = vmul.f32 0.5, %v1562
      %v1564 = vsub.f32 1.5, %v1563
      %v1565 = vmul.f32 %v1560, %v1564
      %vm1566 = vweird.f32 %v1451
      %vm1567 = vweird.f32 %v1560
      %vm1568 = vmor %vm1566, %vm1567
      %v1569 = vsel %vm1568, %v1560, %v1565
      %v1570 = vrsqrt.pop %v1452
      %v1571 = vmul.f32 %v1570, %v1452
      %v1572 = vmul.f32 %v1571, %v1570
      %v1573 = vmul.f32 0.5, %v1572
      %v1574 = vsub.f32 1.5, %v1573
      %v1575 = vmul.f32 %v1570, %v1574
      %vm1576 = vweird.f32 %v1452
      %vm1577 = vweird.f32 %v1570
      %vm1578 = vmor %vm1576, %vm1577
      %v1579 = vsel %vm1578, %v1570, %v1575
      %v1580 = vrsqrt.pop %v1453
      %v1581 = vmul.f32 %v1580, %v1453
      %v1582 = vmul.f32 %v1581, %v1580
      %v1583 = vmul.f32 0.5, %v1582
      %v1584 = vsub.f32 1.5, %v1583
      %v1585 = vmul.f32 %v1580, %v1584
      %vm1586 = vweird.f32 %v1453
      %vm1587 = vweird.f32 %v1580
      %vm1588 = vmor %vm1586, %vm1587
      %v1589 = vsel %vm1588, %v1580, %v1585
      %v1590 = vrsqrt.pop %v1454
      %v1591 = vmul.f32 %v1590, %v1454
      %v1592 = vmul.f32 %v1591, %v1590
      %v1593 = vmul.f32 0.5, %v1592
      %v1594 = vsub.f32 1.5, %v1593
      %v1595 = vmul.f32 %v1590, %v1594
      %vm1596 = vweird.f32 %v1454
      %vm1597 = vweird.f32 %v1590
      %vm1598 = vmor %vm1596, %vm1597
      %v1599 = vsel %vm1598, %v1590, %v1595
      %v1600 = vrsqrt.pop %v1455
      %v1601 = vmul.f32 %v1600, %v1455
      %v1602 = vmul.f32 %v1601, %v1600
      %v1603 = vmul.f32 0.5, %v1602
      %v1604 = vsub.f32 1.5, %v1603
      %v1605 = vmul.f32 %v1600, %v1604
      %vm1606 = vweird.f32 %v1455
      %vm1607 = vweird.f32 %v1600
      %vm1608 = vmor %vm1606, %vm1607
      %v1609 = vsel %vm1608, %v1600, %v1605
      %v1610 = vrsqrt.pop %v1456
      %v1611 = vmul.f32 %v1610, %v1456
      %v1612 = vmul.f32 %v1611, %v1610
      %v1613 = vmul.f32 0.5, %v1612
      %v1614 = vsub.f32 1.5, %v1613
      %v1615 = vmul.f32 %v1610, %v1614
      %vm1616 = vweird.f32 %v1456
      %vm1617 = vweird.f32 %v1610
      %vm1618 = vmor %vm1616, %vm1617
      %v1619 = vsel %vm1618, %v1610, %v1615
      %v1620 = vrsqrt.pop %v1457
      %v1621 = vmul.f32 %v1620, %v1457
      %v1622 = vmul.f32 %v1621, %v1620
      %v1623 = vmul.f32 0.5, %v1622
      %v1624 = vsub.f32 1.5, %v1623
      %v1625 = vmul.f32 %v1620, %v1624
      %vm1626 = vweird.f32 %v1457
      %vm1627 = vweird.f32 %v1620
      %vm1628 = vmor %vm1626, %vm1627
      %v1629 = vsel %vm1628, %v1620, %v1625
      %v1630 = vrsqrt.pop %v1458
      %v1631 = vmul.f32 %v1630, %v1458
      %v1632 = vmul.f32 %v1631, %v1630
      %v1633 = vmul.f32 0.5, %v1632
      %v1634 = vsub.f32 1.5, %v1633
      %v1635 = vmul.f32 %v1630, %v1634
      %vm1636 = vweird.f32 %v1458
      %vm1637 = vweird.f32 %v1630
      %vm1638 = vmor %vm1636, %vm1637
      %v1639 = vsel %vm1638, %v1630, %v1635
      %v1640 = vrsqrt.pop %v1459
      %v1641 = vmul.f32 %v1640, %v1459
      %v1642 = vmul.f32 %v1641, %v1640
      %v1643 = vmul.f32 0.5, %v1642
      %v1644 = vsub.f32 1.5, %v1643
      %v1645 = vmul.f32 %v1640, %v1644
      %vm1646 = vweird.f32 %v1459
      %vm1647 = vweird.f32 %v1640
      %vm1648 = vmor %vm1646, %vm1647
      %v1649 = vsel %vm1648, %v1640, %v1645
      %v1650 = vmul.f32 %v1346, %v1469
      %v1651 = vmul.f32 %v1347, %v1479
      %v1652 = vmul.f32 %v1348, %v1489
      %v1653 = vmul.f32 %v1349, %v1499
      %v1654 = vmul.f32 %v1350, %v1509
      %v1655 = vmul.f32 %v1351, %v1519
      %v1656 = vmul.f32 %v1352, %v1529
      %v1657 = vmul.f32 %v1353, %v1539
      %v1658 = vmul.f32 %v1354, %v1549
      %v1659 = vmul.f32 %v1355, %v1559
      %v1660 = vmul.f32 %v1356, %v1569
      %v1661 = vmul.f32 %v1357, %v1579
      %v1662 = vmul.f32 %v1358, %v1589
      %v1663 = vmul.f32 %v1359, %v1599
      %v1664 = vmul.f32 %v1360, %v1609
      %v1665 = vmul.f32 %v1361, %v1619
      %v1666 = vmul.f32 %v1362, %v1629
      %v1667 = vmul.f32 %v1363, %v1639
      %v1668 = vmul.f32 %v1364, %v1649
      %v1669 = vld [vmem:[%s3] sm:$0x1]
      %v1670 = vld [vmem:[%s4] sm:$0x1]
      %v1672 = vperm.slane %v1669, 0
      %v1674 = vmul.f32 %v1650, %v1672
      %v1675 = vmul.f32 %v1651, %v1672
      %v1676 = vmul.f32 %v1652, %v1672
      %v1677 = vmul.f32 %v1653, %v1672
      %v1678 = vmul.f32 %v1654, %v1672
      %v1679 = vmul.f32 %v1655, %v1672
      %v1680 = vmul.f32 %v1656, %v1672
      %v1681 = vmul.f32 %v1657, %v1672
      %v1682 = vmul.f32 %v1658, %v1672
      %v1683 = vmul.f32 %v1659, %v1672
      %v1684 = vmul.f32 %v1660, %v1672
      %v1685 = vmul.f32 %v1661, %v1672
      %v1686 = vmul.f32 %v1662, %v1672
      %v1687 = vmul.f32 %v1663, %v1672
      %v1688 = vmul.f32 %v1664, %v1672
      %v1689 = vmul.f32 %v1665, %v1672
      %v1690 = vmul.f32 %v1666, %v1672
      %v1691 = vmul.f32 %v1667, %v1672
      %v1692 = vmul.f32 %v1668, %v1672
      %v1694 = vperm.slane %v1670, 0
      %v1696 = vadd.f32 %v1674, %v1694
      %v1697 = vadd.f32 %v1675, %v1694
      %v1698 = vadd.f32 %v1676, %v1694
      %v1699 = vadd.f32 %v1677, %v1694
      %v1700 = vadd.f32 %v1678, %v1694
      %v1701 = vadd.f32 %v1679, %v1694
      %v1702 = vadd.f32 %v1680, %v1694
      %v1703 = vadd.f32 %v1681, %v1694
      %v1704 = vadd.f32 %v1682, %v1694
      %v1705 = vadd.f32 %v1683, %v1694
      %v1706 = vadd.f32 %v1684, %v1694
      %v1707 = vadd.f32 %v1685, %v1694
      %v1708 = vadd.f32 %v1686, %v1694
      %v1709 = vadd.f32 %v1687, %v1694
      %v1710 = vadd.f32 %v1688, %v1694
      %v1711 = vadd.f32 %v1689, %v1694
      %v1712 = vadd.f32 %v1690, %v1694
      %v1713 = vadd.f32 %v1691, %v1694
      %v1714 = vadd.f32 %v1692, %v1694
      %1715 = vst [vmem:[%s226] sm:$0xff] %v1696
      %1716 = vst [vmem:[%s226 + $0x8] sm:$0xff] %v1697
      %1717 = vst [vmem:[%s226 + $0x10] sm:$0xff] %v1698
      %1718 = vst [vmem:[%s226 + $0x18] sm:$0xff] %v1699
      %1719 = vst [vmem:[%s226 + $0x20] sm:$0xff] %v1700
      %1720 = vst [vmem:[%s226 + $0x28] sm:$0xff] %v1701
      %1721 = vst [vmem:[%s226 + $0x30] sm:$0xff] %v1702
      %1722 = vst [vmem:[%s226 + $0x38] sm:$0xff] %v1703
      %1723 = vst [vmem:[%s226 + $0x40] sm:$0xff] %v1704
      %1724 = vst [vmem:[%s226 + $0x48] sm:$0xff] %v1705
      %1725 = vst [vmem:[%s226 + $0x50] sm:$0xff] %v1706
      %1726 = vst [vmem:[%s226 + $0x58] sm:$0xff] %v1707
      %1727 = vst [vmem:[%s226 + $0x60] sm:$0xff] %v1708
      %1728 = vst [vmem:[%s226 + $0x68] sm:$0xff] %v1709
      %1729 = vst [vmem:[%s226 + $0x70] sm:$0xff] %v1710
      %1730 = vst [vmem:[%s226 + $0x78] sm:$0xff] %v1711
      %1731 = vst [vmem:[%s226 + $0x80] sm:$0xff] %v1712
      %1732 = vst [vmem:[%s226 + $0x88] sm:$0xff] %v1713
      %1733 = vst [vmem:[%s226 + $0x90] sm:$0xff] %v1714
      %s1734 = smul.u32 19, %s16
      %p1735 = scmp.lt.s32.totalorder %s1734, 37
      %s1736 = scalar_select %p1735, %s1734, 37
      %s1737 = smul.addr %s1736, 8
      %s1738 = scalar_lea.vmem %s5, %s1737
      // Predicated region
      $region41: #{projection_pallas.1} parent=39 // pred_check
        %p1739 = pneg %p144
      $region42: #{projection_pallas.1} parent=39 // pred_check_branch
        %1741 = sbr.rel (%p1739) target = $region44
      $region43: #{projection_pallas.1} parent=39 // pred_region
        %s1742 = smul.u32 19, %s16
      $region44: #{projection_pallas.1} parent=39 // pred_fallthru
        _
    $region40: #{projection_pallas.1} parent=5 // pred_fallthru
      _
    %p1743 = scmp.le.s32.totalorder 2, %s11
    // Predicated region
    $region45: #{projection_pallas.1} parent=5 // pred_check
      %p1744 = pneg %p1743
    $region46: #{projection_pallas.1} parent=5 // pred_check_branch
      %1746 = sbr.rel (%p1744) target = $region48
    $region47: #{projection_pallas.1} parent=5 // pred_region
      %s1747 = ssub.s32 %s11, 2
      // Predicated region
      $region49: #{projection_pallas.1} parent=47 // pred_check
        %p1748 = pneg %p150
      $region50: #{projection_pallas.1} parent=47 // pred_check_branch
        %1750 = sbr.rel (%p1748) target = $region52
      $region51: #{projection_pallas.1} parent=47 // pred_region
        %s1751 = smul.u32 19, %s17
        %p1752 = scmp.lt.s32.totalorder %s1751, 37
        %s1753 = scalar_select %p1752, %s1751, 37
        %s1754 = smul.addr %s1753, 8
        %s1755 = scalar_lea.vmem %s5, %s1754
      $region52: #{projection_pallas.1} parent=47 // pred_fallthru
        _
    $region48: #{projection_pallas.1} parent=5 // pred_fallthru
      _
  $region6: #{projection_pallas.1} parent=0 // loop_footer
    %s15 = sadd.s32 1, %s11
  $region7: #{projection_pallas.1} parent=0 // loop_footer_branch
    %10 = sbr.rel target = $region3
  $region8: #{projection_pallas.1} parent=0 // loop_exit
    _

</llo_original>
